<compile_context>
chip_gen: v7x
topology: tpu7x:2x2x1
jax: 0.10.0
libtpu: 0.0.40
codegen_flags: <defaults>
</compile_context>

<pallas_src>
import functools

import jax
import jax.numpy as jnp
from jax.experimental import pallas as pl
from jax.experimental.pallas import tpu as pltpu


def _round_up(x, m):
    return (x + m - 1) // m * m


def _vmem_limit_bytes():
    # v5e/v6e: 128 MiB physical VMEM, v7x: 64 MiB.  Leave ~25% headroom.
    try:
        cap = pltpu.get_tpu_info().vmem_capacity_bytes
    except Exception:
        cap = 64 * 1024 * 1024
    return min(100 * 1024 * 1024, (int(cap) * 3) // 4)


def memn2n_kernel(story_ref, query_ref, w_all_ref, w_q_ref, ts_ref, w_out_ref,
                  ahat_ref, probs_ref, *, max_hops, emb_dim, num_vocab):
    H, D, V = max_hops, emb_dim, num_vocab
    S = ts_ref.shape[0]
    tb = query_ref.shape[0]
    Vp = w_all_ref.shape[0]                      # padded (lane-dense) vocab

    def bow_counts(tok):
        # tok: (rows, n_words) int32 token ids -> (rows, Vp) bf16 bag-of-words counts.
        rows, n_words = tok.shape
        lanes = jax.lax.broadcasted_iota(jnp.int32, (rows, Vp), 1)
        cnt = jnp.zeros((rows, Vp), jnp.float32)
        for w in range(n_words):                 # static unroll; word count is small
            cnt = cnt + (lanes == tok[:, w:w + 1]).astype(jnp.float32)
        return cnt.astype(jnp.bfloat16)          # small integers -> exact in bf16

    story_cnt = bow_counts(story_ref[...])       # (tb*S, Vp) bf16
    query_cnt = bow_counts(query_ref[...])       # (tb, Vp)   bf16

    # All (H+1) story-table projections in ONE lane-dense GEMM ((H+1)*D lanes),
    # temporal embeddings added in the same fused f32 slab.
    proj = jnp.dot(story_cnt, w_all_ref[...],
                   preferred_element_type=jnp.float32)          # (tb*S, (H+1)*D)
    proj = proj.reshape(tb, S, (H + 1) * D) + ts_ref[...][None]

    # u0 = sum over query words of emb_0(query) == query counts @ emb_0 only.
    u = jnp.dot(query_cnt, w_q_ref[...],
                preferred_element_type=jnp.float32)             # (tb, D) f32

    for hop in range(H):                                        # static, small trip count
        m = proj[:, :, hop * D:(hop + 1) * D]                   # A(story)+T_A
        c = proj[:, :, (hop + 1) * D:(hop + 2) * D]             # C(story)+T_C

        # attention over memory slots (softmax over S), exact divide in f32
        scores = jnp.sum(m * u[:, None, :], axis=2)             # (tb, S)
        scores = scores - jnp.max(scores, axis=1, keepdims=True)
        e = jnp.exp(scores)
        att = e / jnp.sum(e, axis=1, keepdims=True)

        u = u + jnp.sum(att[:, :, None] * c, axis=1)            # (tb, D)

    # ahat = u @ W.T ; W = embs[max_hops] pre-transposed/vocab-padded in the
    # wrapper -> lane-dense MXU matmul, padded columns are exactly 0.
    ahat = jnp.dot(u.astype(jnp.bfloat16), w_out_ref[...],
                   preferred_element_type=jnp.float32)          # (tb, Vp)
    ahat_ref[...] = ahat

    # Output softmax (exact normalization); padded vocab lanes zeroed before sum.
    a = ahat - jnp.max(ahat, axis=1, keepdims=True)
    ea = jnp.exp(a)
    if Vp != V:
        lanes = jax.lax.broadcasted_iota(jnp.int32, ea.shape, 1)
        ea = jnp.where(lanes < V, ea, 0.0)
    probs_ref[...] = ea / jnp.sum(ea, axis=1, keepdims=True)


def memn2n_forward(story, query, embs, ts, *, max_hops, num_vocab,
                   batch_tile=128, min_batch_tiles=2):
    B, S, L = story.shape
    H = max_hops
    V = num_vocab
    D = embs.shape[-1]
    Vp = _round_up(V, 128)                       # lane-dense K and output lanes

    # Batch tiling: tb multiple of 8 (sublanes); ensure >= min_batch_tiles grid
    # steps so "parallel" semantics shard the grid across v7x's 2 TensorCores.
    tb = min(batch_tile, max(8, _round_up(pl.cdiv(B, min_batch_tiles), 8)))
    Bp = max(_round_up(B, tb), min_batch_tiles * tb)

    if Bp != B:                                  # pad batch with token 0 rows
        story = jnp.pad(story, ((0, Bp - B), (0, 0), (0, 0)))
        query = jnp.pad(query, ((0, Bp - B), (0, 0)))

    # Flatten story rows in the wrapper: the kernel's dominant GEMM input block
    # is a contiguous (tb*S, L) slab, no in-kernel leading-dim relayout.
    story_flat = story.reshape(Bp * S, L).astype(jnp.int32)
    query = query.astype(jnp.int32)

    # Fuse all (H+1) embedding tables into one lane-dense (Vp, (H+1)*D) bf16
    # weight (vocab rows padded with zeros) and the temporal embeddings into a
    # matching (S, (H+1)*D) f32 slab.  NOTE: as in the PyTorch module, normal_()
    # overwrites the padding row, so token 0 contributes like any other token.
    w_all = jnp.zeros((Vp, (H + 1) * D), jnp.bfloat16).at[:V].set(
        jnp.transpose(embs, (1, 0, 2)).reshape(V, (H + 1) * D).astype(jnp.bfloat16))
    w_q = w_all[:, :D]                                        # query -> emb_0 only
    ts_all = jnp.transpose(ts, (1, 0, 2)).reshape(S, (H + 1) * D).astype(jnp.float32)
    # Output projection W = embs[H], pre-transposed to (D, Vp); padded cols = 0.
    w_out_t = jnp.zeros((D, Vp), jnp.bfloat16).at[:, :V].set(embs[H].T.astype(jnp.bfloat16))

    kernel = functools.partial(memn2n_kernel, max_hops=H, emb_dim=D, num_vocab=V)
    ahat, probs = pl.pallas_call(
        kernel,
        out_shape=(jax.ShapeDtypeStruct((Bp, Vp), jnp.float32),
                   jax.ShapeDtypeStruct((Bp, Vp), jnp.float32)),
        grid=(Bp // tb,),
        in_specs=[
            pl.BlockSpec((tb * S, L), lambda i: (i, 0)),          # story tokens (tiled on B)
            pl.BlockSpec((tb, query.shape[1]), lambda i: (i, 0)), # query tokens (tiled on B)
            pl.BlockSpec((Vp, (H + 1) * D), lambda i: (0, 0)),    # fused embedding tables
            pl.BlockSpec((Vp, D), lambda i: (0, 0)),              # query embedding table
            pl.BlockSpec((S, (H + 1) * D), lambda i: (0, 0)),     # fused temporal embeddings
            pl.BlockSpec((D, Vp), lambda i: (0, 0)),              # output projection W.T
        ],
        out_specs=(
            pl.BlockSpec((tb, Vp), lambda i: (i, 0)),
            pl.BlockSpec((tb, Vp), lambda i: (i, 0)),
        ),
        compiler_params=pltpu.CompilerParams(
            dimension_semantics=("parallel",),       # shard batch tiles across TCs
            vmem_limit_bytes=_vmem_limit_bytes(),    # chip-aware cap with headroom
        ),
    )(story_flat, query, w_all, w_q, ts_all, w_out_t)

    return ahat[:B, :V], probs[:B, :V]


def memn2n_ref(story, query, embs, ts, max_hops):
    """Plain-JAX mirror of the PyTorch forward (with real gathers), for checking."""
    u = jnp.sum(embs[0][query], axis=1)                                  # (B, D)
    for hop in range(max_hops):
        m = jnp.sum(embs[hop][story], axis=2) + ts[hop]                  # (B, S, D)
        c = jnp.sum(embs[hop + 1][story], axis=2) + ts[hop + 1]
        scores = jnp.sum(m * u[:, None, :], axis=2)                      # (B, S)
        att = jax.nn.softmax(scores, axis=1)
        o = jnp.sum(att[:, :, None] * c, axis=1)
        u = u + o
    ahat = u @ embs[max_hops].T
    return ahat, jax.nn.softmax(ahat, axis=1)


if __name__ == "__main__":
    # Small, MemN2N-consistent settings.
    settings = dict(embedding_dim=32, max_hops=3, num_vocab=64, max_story_size=8)
    B, L, Q = 4, 6, 5
    H = settings["max_hops"]
    V = settings["num_vocab"]
    D = settings["embedding_dim"]
    S = settings["max_story_size"]

    key = jax.random.PRNGKey(0)
    k_emb, k_t, k_story, k_query = jax.random.split(key, 4)

    # (H+1) embedding tables ~ N(0, 0.1); (H+1) temporal embeddings ~ N(0, 0.1)
    embs = 0.1 * jax.random.normal(k_emb, (H + 1, V, D), dtype=jnp.float32)
    ts = 0.1 * jax.random.normal(k_t, (H + 1, S, D), dtype=jnp.float32)

    story = jax.random.randint(k_story, (B, S, L), 0, V, dtype=jnp.int32)
    query = jax.random.randint(k_query, (B, Q), 0, V, dtype=jnp.int32)

    ahat, probs = memn2n_forward(story, query, embs, ts,
                                 max_hops=H, num_vocab=V)
    jax.block_until_ready((ahat, probs))

    # Correctness check against the pure-f32 JAX reference (kernel uses bf16
    # weights on the MXU -> ahat tolerance loosened accordingly; softmaxes are
    # exact divides so probabilities normalize tightly).
    ahat_ref, probs_ref = memn2n_ref(story, query, embs, ts, H)
    assert ahat.shape == (B, V) and probs.shape == (B, V)
    assert jnp.allclose(ahat, ahat_ref, atol=3e-2, rtol=3e-2)
    assert jnp.allclose(probs, probs_ref, atol=2e-3, rtol=2e-2)
    assert jnp.allclose(jnp.sum(probs, axis=1), 1.0, atol=1e-3)

    print("KERNEL_OK")
</pallas_src>

<mosaic_0001>
module attributes {stable_mosaic.version = 11 : i64} {
  func.func @memn2n_kernel(%arg0: i32, %arg1: memref<64x6xi32, #tpu.memory_space<vmem>>, %arg2: memref<8x5xi32, #tpu.memory_space<vmem>>, %arg3: memref<128x128xbf16, #tpu.memory_space<vmem>>, %arg4: memref<128x32xbf16, #tpu.memory_space<vmem>>, %arg5: memref<8x128xf32, #tpu.memory_space<vmem>>, %arg6: memref<32x128xbf16, #tpu.memory_space<vmem>>, %arg7: memref<8x128xf32, #tpu.memory_space<vmem>>, %arg8: memref<8x128xf32, #tpu.memory_space<vmem>>) attributes {dimension_semantics = [#tpu.dimension_semantics<parallel>], iteration_bounds = array<i64: 2>, scalar_prefetch = 0 : i64, scratch_operands = 0 : i64, tpu.core_type = #tpu.core_type<tc>, window_params = [{transform_indices = @transform_0, window_bounds = array<i64: 64, 6>}, {transform_indices = @transform_1, window_bounds = array<i64: 8, 5>}, {pipeline_mode = #tpu.pipeline_mode<synchronous>, transform_indices = @transform_2, window_bounds = array<i64: 128, 128>}, {pipeline_mode = #tpu.pipeline_mode<synchronous>, transform_indices = @transform_3, window_bounds = array<i64: 128, 32>}, {pipeline_mode = #tpu.pipeline_mode<synchronous>, transform_indices = @transform_4, window_bounds = array<i64: 8, 128>}, {pipeline_mode = #tpu.pipeline_mode<synchronous>, transform_indices = @transform_5, window_bounds = array<i64: 32, 128>}, {transform_indices = @transform_6, window_bounds = array<i64: 8, 128>}, {transform_indices = @transform_7, window_bounds = array<i64: 8, 128>}]} {
    %c0 = arith.constant 0 : index
    %c0_0 = arith.constant 0 : index
    %0 = vector.load %arg1[%c0, %c0_0] : memref<64x6xi32, #tpu.memory_space<vmem>>, vector<64x6xi32>
    %1 = tpu.iota {dimensions = array<i32: 1>} : vector<64x128xi32>
    %cst = arith.constant 0.000000e+00 : f32
    %2 = vector.broadcast %cst : f32 to vector<64x128xf32>
    %3 = vector.extract_strided_slice %0 {offsets = [0, 0], sizes = [64, 1], strides = [1, 1]} : vector<64x6xi32> to vector<64x1xi32>
    %4 = vector.broadcast %3 : vector<64x1xi32> to vector<64x128xi32>
    %5 = arith.cmpi eq, %1, %4 : vector<64x128xi32>
    %6 = arith.extui %5 : vector<64x128xi1> to vector<64x128xi32>
    %7 = arith.sitofp %6 : vector<64x128xi32> to vector<64x128xf32>
    %8 = arith.addf %2, %7 : vector<64x128xf32>
    %9 = vector.extract_strided_slice %0 {offsets = [0, 1], sizes = [64, 1], strides = [1, 1]} : vector<64x6xi32> to vector<64x1xi32>
    %10 = vector.broadcast %9 : vector<64x1xi32> to vector<64x128xi32>
    %11 = arith.cmpi eq, %1, %10 : vector<64x128xi32>
    %12 = arith.extui %11 : vector<64x128xi1> to vector<64x128xi32>
    %13 = arith.sitofp %12 : vector<64x128xi32> to vector<64x128xf32>
    %14 = arith.addf %8, %13 : vector<64x128xf32>
    %15 = vector.extract_strided_slice %0 {offsets = [0, 2], sizes = [64, 1], strides = [1, 1]} : vector<64x6xi32> to vector<64x1xi32>
    %16 = vector.broadcast %15 : vector<64x1xi32> to vector<64x128xi32>
    %17 = arith.cmpi eq, %1, %16 : vector<64x128xi32>
    %18 = arith.extui %17 : vector<64x128xi1> to vector<64x128xi32>
    %19 = arith.sitofp %18 : vector<64x128xi32> to vector<64x128xf32>
    %20 = arith.addf %14, %19 : vector<64x128xf32>
    %21 = vector.extract_strided_slice %0 {offsets = [0, 3], sizes = [64, 1], strides = [1, 1]} : vector<64x6xi32> to vector<64x1xi32>
    %22 = vector.broadcast %21 : vector<64x1xi32> to vector<64x128xi32>
    %23 = arith.cmpi eq, %1, %22 : vector<64x128xi32>
    %24 = arith.extui %23 : vector<64x128xi1> to vector<64x128xi32>
    %25 = arith.sitofp %24 : vector<64x128xi32> to vector<64x128xf32>
    %26 = arith.addf %20, %25 : vector<64x128xf32>
    %27 = vector.extract_strided_slice %0 {offsets = [0, 4], sizes = [64, 1], strides = [1, 1]} : vector<64x6xi32> to vector<64x1xi32>
    %28 = vector.broadcast %27 : vector<64x1xi32> to vector<64x128xi32>
    %29 = arith.cmpi eq, %1, %28 : vector<64x128xi32>
    %30 = arith.extui %29 : vector<64x128xi1> to vector<64x128xi32>
    %31 = arith.sitofp %30 : vector<64x128xi32> to vector<64x128xf32>
    %32 = arith.addf %26, %31 : vector<64x128xf32>
    %33 = vector.extract_strided_slice %0 {offsets = [0, 5], sizes = [64, 1], strides = [1, 1]} : vector<64x6xi32> to vector<64x1xi32>
    %34 = vector.broadcast %33 : vector<64x1xi32> to vector<64x128xi32>
    %35 = arith.cmpi eq, %1, %34 : vector<64x128xi32>
    %36 = arith.extui %35 : vector<64x128xi1> to vector<64x128xi32>
    %37 = arith.sitofp %36 : vector<64x128xi32> to vector<64x128xf32>
    %38 = arith.addf %32, %37 : vector<64x128xf32>
    %39 = arith.truncf %38 : vector<64x128xf32> to vector<64x128xbf16>
    %c0_1 = arith.constant 0 : index
    %c0_2 = arith.constant 0 : index
    %40 = vector.load %arg2[%c0_1, %c0_2] : memref<8x5xi32, #tpu.memory_space<vmem>>, vector<8x5xi32>
    %41 = tpu.iota {dimensions = array<i32: 1>} : vector<8x128xi32>
    %cst_3 = arith.constant 0.000000e+00 : f32
    %42 = vector.broadcast %cst_3 : f32 to vector<8x128xf32>
    %43 = vector.extract_strided_slice %40 {offsets = [0, 0], sizes = [8, 1], strides = [1, 1]} : vector<8x5xi32> to vector<8x1xi32>
    %44 = vector.broadcast %43 : vector<8x1xi32> to vector<8x128xi32>
    %45 = arith.cmpi eq, %41, %44 : vector<8x128xi32>
    %46 = arith.extui %45 : vector<8x128xi1> to vector<8x128xi32>
    %47 = arith.sitofp %46 : vector<8x128xi32> to vector<8x128xf32>
    %48 = arith.addf %42, %47 : vector<8x128xf32>
    %49 = vector.extract_strided_slice %40 {offsets = [0, 1], sizes = [8, 1], strides = [1, 1]} : vector<8x5xi32> to vector<8x1xi32>
    %50 = vector.broadcast %49 : vector<8x1xi32> to vector<8x128xi32>
    %51 = arith.cmpi eq, %41, %50 : vector<8x128xi32>
    %52 = arith.extui %51 : vector<8x128xi1> to vector<8x128xi32>
    %53 = arith.sitofp %52 : vector<8x128xi32> to vector<8x128xf32>
    %54 = arith.addf %48, %53 : vector<8x128xf32>
    %55 = vector.extract_strided_slice %40 {offsets = [0, 2], sizes = [8, 1], strides = [1, 1]} : vector<8x5xi32> to vector<8x1xi32>
    %56 = vector.broadcast %55 : vector<8x1xi32> to vector<8x128xi32>
    %57 = arith.cmpi eq, %41, %56 : vector<8x128xi32>
    %58 = arith.extui %57 : vector<8x128xi1> to vector<8x128xi32>
    %59 = arith.sitofp %58 : vector<8x128xi32> to vector<8x128xf32>
    %60 = arith.addf %54, %59 : vector<8x128xf32>
    %61 = vector.extract_strided_slice %40 {offsets = [0, 3], sizes = [8, 1], strides = [1, 1]} : vector<8x5xi32> to vector<8x1xi32>
    %62 = vector.broadcast %61 : vector<8x1xi32> to vector<8x128xi32>
    %63 = arith.cmpi eq, %41, %62 : vector<8x128xi32>
    %64 = arith.extui %63 : vector<8x128xi1> to vector<8x128xi32>
    %65 = arith.sitofp %64 : vector<8x128xi32> to vector<8x128xf32>
    %66 = arith.addf %60, %65 : vector<8x128xf32>
    %67 = vector.extract_strided_slice %40 {offsets = [0, 4], sizes = [8, 1], strides = [1, 1]} : vector<8x5xi32> to vector<8x1xi32>
    %68 = vector.broadcast %67 : vector<8x1xi32> to vector<8x128xi32>
    %69 = arith.cmpi eq, %41, %68 : vector<8x128xi32>
    %70 = arith.extui %69 : vector<8x128xi1> to vector<8x128xi32>
    %71 = arith.sitofp %70 : vector<8x128xi32> to vector<8x128xf32>
    %72 = arith.addf %66, %71 : vector<8x128xf32>
    %73 = arith.truncf %72 : vector<8x128xf32> to vector<8x128xbf16>
    %c0_4 = arith.constant 0 : index
    %c0_5 = arith.constant 0 : index
    %74 = vector.load %arg3[%c0_4, %c0_5] : memref<128x128xbf16, #tpu.memory_space<vmem>>, vector<128x128xbf16>
    %cst_6 = arith.constant dense<0.000000e+00> : vector<64x128xf32>
    %75 = tpu.matmul %39, %74, %cst_6 {dimension_numbers = #tpu.dot_dimension_numbers<[1], [0], [0], [1], [0, 0, 1, 1], [], []>} : vector<64x128xbf16>, vector<128x128xbf16>, vector<64x128xf32> -> vector<64x128xf32>
    %76 = vector.shape_cast %75 : vector<64x128xf32> to vector<8x8x128xf32>
    %c0_7 = arith.constant 0 : index
    %c0_8 = arith.constant 0 : index
    %77 = vector.load %arg5[%c0_7, %c0_8] : memref<8x128xf32, #tpu.memory_space<vmem>>, vector<8x128xf32>
    %78 = vector.shape_cast %77 : vector<8x128xf32> to vector<1x8x128xf32>
    %79 = vector.broadcast %78 : vector<1x8x128xf32> to vector<8x8x128xf32>
    %80 = arith.addf %76, %79 : vector<8x8x128xf32>
    %c0_9 = arith.constant 0 : index
    %c0_10 = arith.constant 0 : index
    %81 = vector.load %arg4[%c0_9, %c0_10] : memref<128x32xbf16, #tpu.memory_space<vmem>>, vector<128x32xbf16>
    %cst_11 = arith.constant dense<0.000000e+00> : vector<8x32xf32>
    %82 = tpu.matmul %73, %81, %cst_11 {dimension_numbers = #tpu.dot_dimension_numbers<[1], [0], [0], [1], [0, 0, 1, 1], [], []>} : vector<8x128xbf16>, vector<128x32xbf16>, vector<8x32xf32> -> vector<8x32xf32>
    %83 = vector.extract_strided_slice %80 {offsets = [0, 0, 0], sizes = [8, 8, 32], strides = [1, 1, 1]} : vector<8x8x128xf32> to vector<8x8x32xf32>
    %84 = vector.extract_strided_slice %80 {offsets = [0, 0, 32], sizes = [8, 8, 32], strides = [1, 1, 1]} : vector<8x8x128xf32> to vector<8x8x32xf32>
    %85 = vector.shape_cast %82 : vector<8x32xf32> to vector<8x1x32xf32>
    %86 = vector.broadcast %85 : vector<8x1x32xf32> to vector<8x8x32xf32>
    %87 = arith.mulf %83, %86 : vector<8x8x32xf32>
    %cst_12 = arith.constant dense<0.000000e+00> : vector<8x8xf32>
    %88 = vector.multi_reduction <add>, %87, %cst_12 [2] : vector<8x8x32xf32> to vector<8x8xf32>
    %cst_13 = arith.constant dense<0xFF800000> : vector<8xf32>
    %89 = vector.multi_reduction <maximumf>, %88, %cst_13 [1] : vector<8x8xf32> to vector<8xf32>
    %90 = vector.shape_cast %89 : vector<8xf32> to vector<8x1xf32>
    %91 = vector.broadcast %90 : vector<8x1xf32> to vector<8x8xf32>
    %92 = arith.subf %88, %91 : vector<8x8xf32>
    %93 = math.exp %92 : vector<8x8xf32>
    %cst_14 = arith.constant dense<0.000000e+00> : vector<8xf32>
    %94 = vector.multi_reduction <add>, %93, %cst_14 [1] : vector<8x8xf32> to vector<8xf32>
    %95 = vector.shape_cast %94 : vector<8xf32> to vector<8x1xf32>
    %96 = vector.broadcast %95 : vector<8x1xf32> to vector<8x8xf32>
    %97 = arith.divf %93, %96 : vector<8x8xf32>
    %98 = vector.shape_cast %97 : vector<8x8xf32> to vector<8x8x1xf32>
    %99 = vector.broadcast %98 : vector<8x8x1xf32> to vector<8x8x32xf32>
    %100 = arith.mulf %99, %84 : vector<8x8x32xf32>
    %cst_15 = arith.constant dense<0.000000e+00> : vector<8x32xf32>
    %101 = vector.multi_reduction <add>, %100, %cst_15 [1] : vector<8x8x32xf32> to vector<8x32xf32>
    %102 = arith.addf %82, %101 : vector<8x32xf32>
    %103 = vector.extract_strided_slice %80 {offsets = [0, 0, 32], sizes = [8, 8, 32], strides = [1, 1, 1]} : vector<8x8x128xf32> to vector<8x8x32xf32>
    %104 = vector.extract_strided_slice %80 {offsets = [0, 0, 64], sizes = [8, 8, 32], strides = [1, 1, 1]} : vector<8x8x128xf32> to vector<8x8x32xf32>
    %105 = vector.shape_cast %102 : vector<8x32xf32> to vector<8x1x32xf32>
    %106 = vector.broadcast %105 : vector<8x1x32xf32> to vector<8x8x32xf32>
    %107 = arith.mulf %103, %106 : vector<8x8x32xf32>
    %cst_16 = arith.constant dense<0.000000e+00> : vector<8x8xf32>
    %108 = vector.multi_reduction <add>, %107, %cst_16 [2] : vector<8x8x32xf32> to vector<8x8xf32>
    %cst_17 = arith.constant dense<0xFF800000> : vector<8xf32>
    %109 = vector.multi_reduction <maximumf>, %108, %cst_17 [1] : vector<8x8xf32> to vector<8xf32>
    %110 = vector.shape_cast %109 : vector<8xf32> to vector<8x1xf32>
    %111 = vector.broadcast %110 : vector<8x1xf32> to vector<8x8xf32>
    %112 = arith.subf %108, %111 : vector<8x8xf32>
    %113 = math.exp %112 : vector<8x8xf32>
    %cst_18 = arith.constant dense<0.000000e+00> : vector<8xf32>
    %114 = vector.multi_reduction <add>, %113, %cst_18 [1] : vector<8x8xf32> to vector<8xf32>
    %115 = vector.shape_cast %114 : vector<8xf32> to vector<8x1xf32>
    %116 = vector.broadcast %115 : vector<8x1xf32> to vector<8x8xf32>
    %117 = arith.divf %113, %116 : vector<8x8xf32>
    %118 = vector.shape_cast %117 : vector<8x8xf32> to vector<8x8x1xf32>
    %119 = vector.broadcast %118 : vector<8x8x1xf32> to vector<8x8x32xf32>
    %120 = arith.mulf %119, %104 : vector<8x8x32xf32>
    %cst_19 = arith.constant dense<0.000000e+00> : vector<8x32xf32>
    %121 = vector.multi_reduction <add>, %120, %cst_19 [1] : vector<8x8x32xf32> to vector<8x32xf32>
    %122 = arith.addf %102, %121 : vector<8x32xf32>
    %123 = vector.extract_strided_slice %80 {offsets = [0, 0, 64], sizes = [8, 8, 32], strides = [1, 1, 1]} : vector<8x8x128xf32> to vector<8x8x32xf32>
    %124 = vector.extract_strided_slice %80 {offsets = [0, 0, 96], sizes = [8, 8, 32], strides = [1, 1, 1]} : vector<8x8x128xf32> to vector<8x8x32xf32>
    %125 = vector.shape_cast %122 : vector<8x32xf32> to vector<8x1x32xf32>
    %126 = vector.broadcast %125 : vector<8x1x32xf32> to vector<8x8x32xf32>
    %127 = arith.mulf %123, %126 : vector<8x8x32xf32>
    %cst_20 = arith.constant dense<0.000000e+00> : vector<8x8xf32>
    %128 = vector.multi_reduction <add>, %127, %cst_20 [2] : vector<8x8x32xf32> to vector<8x8xf32>
    %cst_21 = arith.constant dense<0xFF800000> : vector<8xf32>
    %129 = vector.multi_reduction <maximumf>, %128, %cst_21 [1] : vector<8x8xf32> to vector<8xf32>
    %130 = vector.shape_cast %129 : vector<8xf32> to vector<8x1xf32>
    %131 = vector.broadcast %130 : vector<8x1xf32> to vector<8x8xf32>
    %132 = arith.subf %128, %131 : vector<8x8xf32>
    %133 = math.exp %132 : vector<8x8xf32>
    %cst_22 = arith.constant dense<0.000000e+00> : vector<8xf32>
    %134 = vector.multi_reduction <add>, %133, %cst_22 [1] : vector<8x8xf32> to vector<8xf32>
    %135 = vector.shape_cast %134 : vector<8xf32> to vector<8x1xf32>
    %136 = vector.broadcast %135 : vector<8x1xf32> to vector<8x8xf32>
    %137 = arith.divf %133, %136 : vector<8x8xf32>
    %138 = vector.shape_cast %137 : vector<8x8xf32> to vector<8x8x1xf32>
    %139 = vector.broadcast %138 : vector<8x8x1xf32> to vector<8x8x32xf32>
    %140 = arith.mulf %139, %124 : vector<8x8x32xf32>
    %cst_23 = arith.constant dense<0.000000e+00> : vector<8x32xf32>
    %141 = vector.multi_reduction <add>, %140, %cst_23 [1] : vector<8x8x32xf32> to vector<8x32xf32>
    %142 = arith.addf %122, %141 : vector<8x32xf32>
    %143 = arith.truncf %142 : vector<8x32xf32> to vector<8x32xbf16>
    %c0_24 = arith.constant 0 : index
    %c0_25 = arith.constant 0 : index
    %144 = vector.load %arg6[%c0_24, %c0_25] : memref<32x128xbf16, #tpu.memory_space<vmem>>, vector<32x128xbf16>
    %cst_26 = arith.constant dense<0.000000e+00> : vector<8x128xf32>
    %145 = tpu.matmul %143, %144, %cst_26 {dimension_numbers = #tpu.dot_dimension_numbers<[1], [0], [0], [1], [0, 0, 1, 1], [], []>} : vector<8x32xbf16>, vector<32x128xbf16>, vector<8x128xf32> -> vector<8x128xf32>
    %c0_27 = arith.constant 0 : index
    %c0_28 = arith.constant 0 : index
    %146 = vector.load %arg7[%c0_27, %c0_28] : memref<8x128xf32, #tpu.memory_space<vmem>>, vector<8x128xf32>
    tpu.vector_store %arg7[%c0_27, %c0_28], %145 {strides = array<i32>} : memref<8x128xf32, #tpu.memory_space<vmem>>, vector<8x128xf32>,
    %cst_29 = arith.constant dense<0xFF800000> : vector<8xf32>
    %147 = vector.multi_reduction <maximumf>, %145, %cst_29 [1] : vector<8x128xf32> to vector<8xf32>
    %148 = vector.shape_cast %147 : vector<8xf32> to vector<8x1xf32>
    %149 = vector.broadcast %148 : vector<8x1xf32> to vector<8x128xf32>
    %150 = arith.subf %145, %149 : vector<8x128xf32>
    %151 = math.exp %150 : vector<8x128xf32>
    %152 = tpu.iota {dimensions = array<i32: 1>} : vector<8x128xi32>
    %c64_i32 = arith.constant 64 : i32
    %153 = vector.broadcast %c64_i32 : i32 to vector<8x128xi32>
    %154 = arith.cmpi slt, %152, %153 : vector<8x128xi32>
    %cst_30 = arith.constant 0.000000e+00 : f32
    %155 = vector.broadcast %cst_30 : f32 to vector<8x128xf32>
    %156 = arith.select %154, %151, %155 : vector<8x128xi1>, vector<8x128xf32>
    %cst_31 = arith.constant dense<0.000000e+00> : vector<8xf32>
    %157 = vector.multi_reduction <add>, %156, %cst_31 [1] : vector<8x128xf32> to vector<8xf32>
    %158 = vector.shape_cast %157 : vector<8xf32> to vector<8x1xf32>
    %159 = vector.broadcast %158 : vector<8x1xf32> to vector<8x128xf32>
    %160 = arith.divf %156, %159 : vector<8x128xf32>
    %c0_32 = arith.constant 0 : index
    %c0_33 = arith.constant 0 : index
    %161 = vector.load %arg8[%c0_32, %c0_33] : memref<8x128xf32, #tpu.memory_space<vmem>>, vector<8x128xf32>
    tpu.vector_store %arg8[%c0_32, %c0_33], %160 {strides = array<i32>} : memref<8x128xf32, #tpu.memory_space<vmem>>, vector<8x128xf32>,
    return
  }
  func.func @transform_0(%arg0: i32) -> (i32, i32) {
    %c0_i32 = arith.constant 0 : i32
    %c0_i32_0 = arith.constant 0 : i32
    return %arg0, %c0_i32 : i32, i32
  }
  func.func @transform_1(%arg0: i32) -> (i32, i32) {
    %c0_i32 = arith.constant 0 : i32
    %c0_i32_0 = arith.constant 0 : i32
    return %arg0, %c0_i32 : i32, i32
  }
  func.func @transform_2(%arg0: i32) -> (i32, i32) {
    %c0_i32 = arith.constant 0 : i32
    %c0_i32_0 = arith.constant 0 : i32
    %c0_i32_1 = arith.constant 0 : i32
    return %c0_i32, %c0_i32_0 : i32, i32
  }
  func.func @transform_3(%arg0: i32) -> (i32, i32) {
    %c0_i32 = arith.constant 0 : i32
    %c0_i32_0 = arith.constant 0 : i32
    %c0_i32_1 = arith.constant 0 : i32
    return %c0_i32, %c0_i32_0 : i32, i32
  }
  func.func @transform_4(%arg0: i32) -> (i32, i32) {
    %c0_i32 = arith.constant 0 : i32
    %c0_i32_0 = arith.constant 0 : i32
    %c0_i32_1 = arith.constant 0 : i32
    return %c0_i32, %c0_i32_0 : i32, i32
  }
  func.func @transform_5(%arg0: i32) -> (i32, i32) {
    %c0_i32 = arith.constant 0 : i32
    %c0_i32_0 = arith.constant 0 : i32
    %c0_i32_1 = arith.constant 0 : i32
    return %c0_i32, %c0_i32_0 : i32, i32
  }
  func.func @transform_6(%arg0: i32) -> (i32, i32) {
    %c0_i32 = arith.constant 0 : i32
    %c0_i32_0 = arith.constant 0 : i32
    return %arg0, %c0_i32 : i32, i32
  }
  func.func @transform_7(%arg0: i32) -> (i32, i32) {
    %c0_i32 = arith.constant 0 : i32
    %c0_i32_0 = arith.constant 0 : i32
    return %arg0, %c0_i32 : i32, i32
  }
}

</mosaic_0001>

<llo_original>
// kernel: tpu_custom_call.1
$region0: #{tpu_custom_call.1}
  #allocation0 [shape = 'u32[]', space=smem, size = 0x4, offset = 0x4, fixed_abs, tag = 'smem constant byte address 0x4 - core index']
  #allocation1 [shape = 'u32[144,128]{1,0:T(1,128)}', space=vmem, size = 0x12000, scoped, tag = 'internal scratch']
  %s0 = inlined_call_operand.vmem [shape: s32[128,6], index: 0, kind: input, shape index: {}]
  %s1 = inlined_call_operand.vmem [shape: s32[16,5], index: 1, kind: input, shape index: {}]
  %s2 = inlined_call_operand.vmem [shape: bf16[128,128], index: 2, kind: input, shape index: {}]
  %s3 = inlined_call_operand.vmem [shape: bf16[128,32], index: 3, kind: input, shape index: {}]
  %s4 = inlined_call_operand.vmem [shape: f32[8,128], index: 4, kind: input, shape index: {}]
  %s5 = inlined_call_operand.vmem [shape: bf16[32,128], index: 5, kind: input, shape index: {}]
  %s6 = inlined_call_operand.hbm [shape: f32[16,128], index: 6, kind: output, shape index: {0}]
  %s7 = inlined_call_operand.hbm [shape: f32[16,128], index: 7, kind: output, shape index: {1}]
  %8 = xla_tuple %s6, %s7
  %s9 = sld [smem:[#allocation0]]
  $region65: #{tpu_custom_call.1} parent=0
    _
  %s11 = ssub.s32 1, %s9
  %s12 = scalar_select 0, %s11, %s9
  $region1: #{tpu_custom_call.1} parent=0
    #allocation2 [shape = 'u8[8192]{0}', space=vmem, size = 0x2000, scoped, tag = 'output window, operand 0']
    #allocation3 [shape = 's32[2]{0}', space=sflag, size = 0x8, scoped, tag = 'scoped memory for tpu_custom_call.1']
    #allocation4 [shape = 'u8[8192]{0}', space=vmem, size = 0x2000, scoped, tag = 'output window, operand 1']
    #allocation5 [shape = 's32[2]{0}', space=sflag, size = 0x8, scoped, tag = 'scoped memory for tpu_custom_call.1']
    %13 = vsyncpa [#allocation3], 0
    %s14 = scalar_lea.sflag [#allocation3], 1
    %15 = vsyncpa %s14, 0
    %16 = vsyncpa [#allocation5], 0
    %s17 = scalar_lea.sflag [#allocation5], 1
    %18 = vsyncpa %s17, 0
    loop: start=0, step=1, limit=4
    $region2: #{tpu_custom_call.1} parent=1 // loop_pre_header
      _
    $region3: #{tpu_custom_call.1} parent=1 // loop_header
      %s20 = sphi 0, %s24
      %p21 = scmp.ge.s32.totalorder %s20, 4
      %s30 = sphi 0, %s32
      %s33 = sphi 0, %s30
      %s34 = sphi 0, %s33
      %s50 = sphi 0, %s34
      %s56 = sphi 0, %s58
      %s59 = sphi 0, %s56
      %s60 = sphi 0, %s59
      %s76 = sphi 0, %s60
      %s80 = sphi 0, %s80
      %s82 = sphi 0, %s80
      %s83 = sphi 0, %s82
      %s97 = sphi 0, %s83
      %s101 = sphi 0, %s101
      %s103 = sphi 0, %s101
      %s104 = sphi 0, %s103
      %s118 = sphi 0, %s104
      %s122 = sphi 0, %s122
      %s124 = sphi 0, %s122
      %s125 = sphi 0, %s124
      %s139 = sphi 0, %s125
      %s143 = sphi 0, %s143
      %s145 = sphi 0, %s143
      %s146 = sphi 0, %s145
      %s160 = sphi 0, %s146
      %s166 = sphi 0, %s168
      %s169 = sphi 0, %s166
      %s170 = sphi 0, %s169
      %s186 = sphi 0, %s170
      %s192 = sphi 0, %s194
      %s195 = sphi 0, %s192
      %s196 = sphi 0, %s195
      %s212 = sphi 0, %s196
    $region4: #{tpu_custom_call.1} parent=1 // loop_header_branch
      %23 = sbr.rel (%p21) target = $region8
    $region5: #{tpu_custom_call.1} parent=1 // loop_body
      %s25 = ssub.s32 %s20, 1
      %s26 = ssub.s32 %s20, 2
      %s27 = sadd.s32 %s20, 1
      %s28 = ssub.s32 %s20, %s27
      %p29 = scmp.eq.s32.totalorder %s28, 0
      %s31 = sadd.s32 %s30, 1
      %s32 = scalar_select %p29, %s30, %s31
      %p35 = pneg %p29
      %p36 = scmp.eq.s32.totalorder %s20, 1
      %p37 = por %p35, %p36
      %p38 = scmp.ne.s32.totalorder %s30, %s33
      %p39 = scmp.eq.s32.totalorder %s20, 0
      %p40 = por %p38, %p39
      %p41 = scmp.ne.s32.totalorder %s30, %s33
      %p42 = scmp.eq.s32.totalorder %s25, 1
      %p43 = por %p41, %p42
      %p44 = scmp.ne.s32.totalorder %s33, %s34
      %p45 = scmp.eq.s32.totalorder %s25, 0
      %p46 = por %p44, %p45
      %p47 = scmp.ne.s32.totalorder %s33, %s34
      %p48 = scmp.eq.s32.totalorder %s26, 1
      %p49 = por %p47, %p48
      %p51 = scmp.ne.s32.totalorder %s34, %s50
      %p52 = scmp.eq.s32.totalorder %s26, 0
      %p53 = por %p51, %p52
      %s54 = ssub.s32 %s20, %s27
      %p55 = scmp.eq.s32.totalorder %s54, 0
      %s57 = sadd.s32 %s56, 1
      %s58 = scalar_select %p55, %s56, %s57
      %p61 = pneg %p55
      %p62 = scmp.eq.s32.totalorder %s20, 1
      %p63 = por %p61, %p62
      %p64 = scmp.ne.s32.totalorder %s56, %s59
      %p65 = scmp.eq.s32.totalorder %s20, 0
      %p66 = por %p64, %p65
      %p67 = scmp.ne.s32.totalorder %s56, %s59
      %p68 = scmp.eq.s32.totalorder %s25, 1
      %p69 = por %p67, %p68
      %p70 = scmp.ne.s32.totalorder %s59, %s60
      %p71 = scmp.eq.s32.totalorder %s25, 0
      %p72 = por %p70, %p71
      %p73 = scmp.ne.s32.totalorder %s59, %s60
      %p74 = scmp.eq.s32.totalorder %s26, 1
      %p75 = por %p73, %p74
      %p77 = scmp.ne.s32.totalorder %s60, %s76
      %p78 = scmp.eq.s32.totalorder %s26, 0
      %p79 = por %p77, %p78
      %s81 = sadd.s32 %s80, 1
      %p84 = scmp.eq.s32.totalorder %s20, 1
      %p85 = scmp.ne.s32.totalorder %s80, %s82
      %p86 = scmp.eq.s32.totalorder %s20, 0
      %p87 = por %p85, %p86
      %p88 = scmp.ne.s32.totalorder %s80, %s82
      %p89 = scmp.eq.s32.totalorder %s25, 1
      %p90 = por %p88, %p89
      %p91 = scmp.ne.s32.totalorder %s82, %s83
      %p92 = scmp.eq.s32.totalorder %s25, 0
      %p93 = por %p91, %p92
      %p94 = scmp.ne.s32.totalorder %s82, %s83
      %p95 = scmp.eq.s32.totalorder %s26, 1
      %p96 = por %p94, %p95
      %p98 = scmp.ne.s32.totalorder %s83, %s97
      %p99 = scmp.eq.s32.totalorder %s26, 0
      %p100 = por %p98, %p99
      %s102 = sadd.s32 %s101, 1
      %p105 = scmp.eq.s32.totalorder %s20, 1
      %p106 = scmp.ne.s32.totalorder %s101, %s103
      %p107 = scmp.eq.s32.totalorder %s20, 0
      %p108 = por %p106, %p107
      %p109 = scmp.ne.s32.totalorder %s101, %s103
      %p110 = scmp.eq.s32.totalorder %s25, 1
      %p111 = por %p109, %p110
      %p112 = scmp.ne.s32.totalorder %s103, %s104
      %p113 = scmp.eq.s32.totalorder %s25, 0
      %p114 = por %p112, %p113
      %p115 = scmp.ne.s32.totalorder %s103, %s104
      %p116 = scmp.eq.s32.totalorder %s26, 1
      %p117 = por %p115, %p116
      %p119 = scmp.ne.s32.totalorder %s104, %s118
      %p120 = scmp.eq.s32.totalorder %s26, 0
      %p121 = por %p119, %p120
      %s123 = sadd.s32 %s122, 1
      %p126 = scmp.eq.s32.totalorder %s20, 1
      %p127 = scmp.ne.s32.totalorder %s122, %s124
      %p128 = scmp.eq.s32.totalorder %s20, 0
      %p129 = por %p127, %p128
      %p130 = scmp.ne.s32.totalorder %s122, %s124
      %p131 = scmp.eq.s32.totalorder %s25, 1
      %p132 = por %p130, %p131
      %p133 = scmp.ne.s32.totalorder %s124, %s125
      %p134 = scmp.eq.s32.totalorder %s25, 0
      %p135 = por %p133, %p134
      %p136 = scmp.ne.s32.totalorder %s124, %s125
      %p137 = scmp.eq.s32.totalorder %s26, 1
      %p138 = por %p136, %p137
      %p140 = scmp.ne.s32.totalorder %s125, %s139
      %p141 = scmp.eq.s32.totalorder %s26, 0
      %p142 = por %p140, %p141
      %s144 = sadd.s32 %s143, 1
      %p147 = scmp.eq.s32.totalorder %s20, 1
      %p148 = scmp.ne.s32.totalorder %s143, %s145
      %p149 = scmp.eq.s32.totalorder %s20, 0
      %p150 = por %p148, %p149
      %p151 = scmp.ne.s32.totalorder %s143, %s145
      %p152 = scmp.eq.s32.totalorder %s25, 1
      %p153 = por %p151, %p152
      %p154 = scmp.ne.s32.totalorder %s145, %s146
      %p155 = scmp.eq.s32.totalorder %s25, 0
      %p156 = por %p154, %p155
      %p157 = scmp.ne.s32.totalorder %s145, %s146
      %p158 = scmp.eq.s32.totalorder %s26, 1
      %p159 = por %p157, %p158
      %p161 = scmp.ne.s32.totalorder %s146, %s160
      %p162 = scmp.eq.s32.totalorder %s26, 0
      %p163 = por %p161, %p162
      %s164 = ssub.s32 %s20, %s27
      %p165 = scmp.eq.s32.totalorder %s164, 0
      %s167 = sadd.s32 %s166, 1
      %s168 = scalar_select %p165, %s166, %s167
      %p171 = pneg %p165
      %p172 = scmp.eq.s32.totalorder %s20, 1
      %p173 = por %p171, %p172
      %p174 = scmp.ne.s32.totalorder %s166, %s169
      %p175 = scmp.eq.s32.totalorder %s20, 0
      %p176 = por %p174, %p175
      %p177 = scmp.ne.s32.totalorder %s166, %s169
      %p178 = scmp.eq.s32.totalorder %s25, 1
      %p179 = por %p177, %p178
      %p180 = scmp.ne.s32.totalorder %s169, %s170
      %p181 = scmp.eq.s32.totalorder %s25, 0
      %p182 = por %p180, %p181
      %p183 = scmp.ne.s32.totalorder %s169, %s170
      %p184 = scmp.eq.s32.totalorder %s26, 1
      %p185 = por %p183, %p184
      %p187 = scmp.ne.s32.totalorder %s170, %s186
      %p188 = scmp.eq.s32.totalorder %s26, 0
      %p189 = por %p187, %p188
      %s190 = ssub.s32 %s20, %s27
      %p191 = scmp.eq.s32.totalorder %s190, 0
      %s193 = sadd.s32 %s192, 1
      %s194 = scalar_select %p191, %s192, %s193
      %p197 = pneg %p191
      %p198 = scmp.eq.s32.totalorder %s20, 1
      %p199 = por %p197, %p198
      %p200 = scmp.ne.s32.totalorder %s192, %s195
      %p201 = scmp.eq.s32.totalorder %s20, 0
      %p202 = por %p200, %p201
      %p203 = scmp.ne.s32.totalorder %s192, %s195
      %p204 = scmp.eq.s32.totalorder %s25, 1
      %p205 = por %p203, %p204
      %p206 = scmp.ne.s32.totalorder %s195, %s196
      %p207 = scmp.eq.s32.totalorder %s25, 0
      %p208 = por %p206, %p207
      %p209 = scmp.ne.s32.totalorder %s195, %s196
      %p210 = scmp.eq.s32.totalorder %s26, 1
      %p211 = por %p209, %p210
      %p213 = scmp.ne.s32.totalorder %s196, %s212
      %p214 = scmp.eq.s32.totalorder %s26, 0
      %p215 = por %p213, %p214
      %p216 = scmp.le.s32.totalorder 1, %s20
      %p217 = scmp.lt.s32.totalorder %s20, 3
      %p218 = pnand %p216, %p217
      %p219 = pneg %p218
      // Predicated region
      $region9: #{tpu_custom_call.1} parent=5 // pred_check
        _
      $region10: #{tpu_custom_call.1} parent=5 // pred_check_branch
        %221 = sbr.rel (%p218) target = $region12
      $region11: #{tpu_custom_call.1} parent=5 // pred_region
        %s222 = ssub.s32 %s20, 1
        // Predicated region
        $region13: #{tpu_custom_call.1} parent=11 // pred_check
          %p223 = pneg %p93
        $region14: #{tpu_custom_call.1} parent=11 // pred_check_branch
          %225 = sbr.rel (%p223) target = $region16
        $region15: #{tpu_custom_call.1} parent=11 // pred_region
          _
        $region16: #{tpu_custom_call.1} parent=11 // pred_fallthru
          _
        // Predicated region
        $region17: #{tpu_custom_call.1} parent=11 // pred_check
          %p226 = pneg %p114
        $region18: #{tpu_custom_call.1} parent=11 // pred_check_branch
          %228 = sbr.rel (%p226) target = $region20
        $region19: #{tpu_custom_call.1} parent=11 // pred_region
          _
        $region20: #{tpu_custom_call.1} parent=11 // pred_fallthru
          _
        // Predicated region
        $region21: #{tpu_custom_call.1} parent=11 // pred_check
          %p229 = pneg %p135
        $region22: #{tpu_custom_call.1} parent=11 // pred_check_branch
          %231 = sbr.rel (%p229) target = $region24
        $region23: #{tpu_custom_call.1} parent=11 // pred_region
          _
        $region24: #{tpu_custom_call.1} parent=11 // pred_fallthru
          _
        // Predicated region
        $region25: #{tpu_custom_call.1} parent=11 // pred_check
          %p232 = pneg %p156
        $region26: #{tpu_custom_call.1} parent=11 // pred_check_branch
          %234 = sbr.rel (%p232) target = $region28
        $region27: #{tpu_custom_call.1} parent=11 // pred_region
          _
        $region28: #{tpu_custom_call.1} parent=11 // pred_fallthru
          _
      $region12: #{tpu_custom_call.1} parent=5 // pred_fallthru
        _
      %p235 = scmp.lt.s32.totalorder %s20, 2
      // Predicated region
      $region29: #{tpu_custom_call.1} parent=5 // pred_check
        %p236 = pneg %p235
      $region30: #{tpu_custom_call.1} parent=5 // pred_check_branch
        %238 = sbr.rel (%p236) target = $region32
      $region31: #{tpu_custom_call.1} parent=5 // pred_region
        // Predicated region
        $region33: #{tpu_custom_call.1} parent=31 // pred_check
          %p239 = pneg %p40
        $region34: #{tpu_custom_call.1} parent=31 // pred_check_branch
          %241 = sbr.rel (%p239) target = $region36
        $region35: #{tpu_custom_call.1} parent=31 // pred_region
          %s242 = smul.u32 8, %s20
          %p243 = scmp.lt.s32.totalorder %s242, 15
          %s244 = scalar_select %p243, %s242, 15
          %s245 = smul.addr %s244, 8
          %s246 = scalar_lea.vmem %s0, %s245
          %s247 = smul.u32 8, %s20
        $region36: #{tpu_custom_call.1} parent=31 // pred_fallthru
          _
        // Predicated region
        $region37: #{tpu_custom_call.1} parent=31 // pred_check
          %p248 = pneg %p66
        $region38: #{tpu_custom_call.1} parent=31 // pred_check_branch
          %250 = sbr.rel (%p248) target = $region40
        $region39: #{tpu_custom_call.1} parent=31 // pred_region
          %p251 = scmp.lt.s32.totalorder %s20, 1
          %s252 = scalar_select %p251, %s20, 1
          %s253 = smul.addr %s252, 8
          %s254 = scalar_lea.vmem %s1, %s253
        $region40: #{tpu_custom_call.1} parent=31 // pred_fallthru
          _
      $region32: #{tpu_custom_call.1} parent=5 // pred_fallthru
        _
      %p255 = scmp.le.s32.totalorder 1, %s20
      %p256 = scmp.lt.s32.totalorder %s20, 3
      %p257 = pnand %p255, %p256
      %p258 = pneg %p257
      // Predicated region
      $region41: #{tpu_custom_call.1} parent=5 // pred_check
        _
      $region42: #{tpu_custom_call.1} parent=5 // pred_check_branch
        %260 = sbr.rel (%p257) target = $region44
      $region43: #{tpu_custom_call.1} parent=5 // pred_region
        %s261 = ssub.s32 %s20, 1
        %s262 = smul.u32 8, %s25
        %p263 = scmp.lt.s32.totalorder %s262, 15
        %s264 = scalar_select %p263, %s262, 15
        %s265 = smul.addr %s264, 8
        %s266 = scalar_lea.vmem %s0, %s265
        %p267 = pneg %p46
        %p268 = pneg %p43
        %p269 = scmp.lt.s32.totalorder %s25, 1
        %s270 = scalar_select %p269, %s25, 1
        %s271 = smul.addr %s270, 8
        %s272 = scalar_lea.vmem %s1, %s271
        %p273 = pneg %p72
        %p274 = pneg %p69
        %p275 = pneg %p93
        %p276 = pneg %p90
        %p277 = pneg %p114
        %p278 = pneg %p111
        %p279 = pneg %p135
        %p280 = pneg %p132
        %p281 = pneg %p156
        %p282 = pneg %p153
        %p283 = pneg %p182
        %p284 = pneg %p179
        %s285 = sand.u32 %s169, 1
        %s286 = scalar_lea.sflag [#allocation3], %s285
        %s287 = sand.u32 %s169, 1
        %s288 = smul.addr %s287, 8
        %s289 = scalar_lea.vmem [#allocation2], %s288
        %p290 = pneg %p208
        %p291 = pneg %p205
        %s292 = sand.u32 %s195, 1
        %s293 = scalar_lea.sflag [#allocation5], %s292
        %s294 = sand.u32 %s195, 1
        %s295 = smul.addr %s294, 8
        %s296 = scalar_lea.vmem [#allocation4], %s295
        %s297 = smul.u32 8, %s25
        %p298 = scmp.lt.s32.totalorder %s297, 15
        %s299 = scalar_select %p298, %s297, 15
        %s300 = smul.addr %s299, 8
        %s301 = scalar_lea.vmem %s0, %s300
        %s302 = smul.u32 8, %s25
        %p303 = scmp.lt.s32.totalorder %s25, 1
        %s304 = scalar_select %p303, %s25, 1
        %s305 = smul.addr %s304, 8
        %s306 = scalar_lea.vmem %s1, %s305
        %v308 = vld [vmem:[%s301] sm:$0xff]
        %v309 = vld [vmem:[%s301 + $0x8] sm:$0xff]
        %v310 = vld [vmem:[%s301 + $0x10] sm:$0xff]
        %v311 = vld [vmem:[%s301 + $0x18] sm:$0xff]
        %v312 = vld [vmem:[%s301 + $0x20] sm:$0xff]
        %v313 = vld [vmem:[%s301 + $0x28] sm:$0xff]
        %v314 = vld [vmem:[%s301 + $0x30] sm:$0xff]
        %v315 = vld [vmem:[%s301 + $0x38] sm:$0xff]
        %v316 = vlaneseq
        %v317 = vand.u32 %v316, 127
        %318 = vset.pattern.permute.xlu0 0
        %319 = vperm.xlu0 %318, %v308
        %v320 = vpop.permute.xlu0 %319
        %321 = vset.pattern.permute.xlu0 0
        %322 = vperm.xlu0 %321, %v309
        %v323 = vpop.permute.xlu0 %322
        %324 = vset.pattern.permute.xlu0 0
        %325 = vperm.xlu0 %324, %v310
        %v326 = vpop.permute.xlu0 %325
        %327 = vset.pattern.permute.xlu0 0
        %328 = vperm.xlu0 %327, %v311
        %v329 = vpop.permute.xlu0 %328
        %330 = vset.pattern.permute.xlu0 0
        %331 = vperm.xlu0 %330, %v312
        %v332 = vpop.permute.xlu0 %331
        %333 = vset.pattern.permute.xlu0 0
        %334 = vperm.xlu0 %333, %v313
        %v335 = vpop.permute.xlu0 %334
        %336 = vset.pattern.permute.xlu0 0
        %337 = vperm.xlu0 %336, %v314
        %v338 = vpop.permute.xlu0 %337
        %339 = vset.pattern.permute.xlu0 0
        %340 = vperm.xlu0 %339, %v315
        %v341 = vpop.permute.xlu0 %340
        %vm342 = vcmp.eq.s32.totalorder %v317, %v320
        %vm343 = vcmp.eq.s32.totalorder %v317, %v323
        %vm344 = vcmp.eq.s32.totalorder %v317, %v326
        %vm345 = vcmp.eq.s32.totalorder %v317, %v329
        %vm346 = vcmp.eq.s32.totalorder %v317, %v332
        %vm347 = vcmp.eq.s32.totalorder %v317, %v335
        %vm348 = vcmp.eq.s32.totalorder %v317, %v338
        %vm349 = vcmp.eq.s32.totalorder %v317, %v341
        %v350 = vsel %vm342, 1, 0
        %v351 = vsel %vm343, 1, 0
        %v352 = vsel %vm344, 1, 0
        %v353 = vsel %vm345, 1, 0
        %v354 = vsel %vm346, 1, 0
        %v355 = vsel %vm347, 1, 0
        %v356 = vsel %vm348, 1, 0
        %v357 = vsel %vm349, 1, 0
        %v358 = vcvt.s32.f32 %v350
        %v359 = vcvt.s32.f32 %v351
        %v360 = vcvt.s32.f32 %v352
        %v361 = vcvt.s32.f32 %v353
        %v362 = vcvt.s32.f32 %v354
        %v363 = vcvt.s32.f32 %v355
        %v364 = vcvt.s32.f32 %v356
        %v365 = vcvt.s32.f32 %v357
        %v366 = vadd.f32 %v358, 0.0
        %v367 = vadd.f32 %v359, 0.0
        %v368 = vadd.f32 %v360, 0.0
        %v369 = vadd.f32 %v361, 0.0
        %v370 = vadd.f32 %v362, 0.0
        %v371 = vadd.f32 %v363, 0.0
        %v372 = vadd.f32 %v364, 0.0
        %v373 = vadd.f32 %v365, 0.0
        %374 = vset.pattern.permute.xlu0 1
        %375 = vperm.xlu0 %374, %v308
        %v376 = vpop.permute.xlu0 %375
        %377 = vset.pattern.permute.xlu0 1
        %378 = vperm.xlu0 %377, %v309
        %v379 = vpop.permute.xlu0 %378
        %380 = vset.pattern.permute.xlu0 1
        %381 = vperm.xlu0 %380, %v310
        %v382 = vpop.permute.xlu0 %381
        %383 = vset.pattern.permute.xlu0 1
        %384 = vperm.xlu0 %383, %v311
        %v385 = vpop.permute.xlu0 %384
        %386 = vset.pattern.permute.xlu0 1
        %387 = vperm.xlu0 %386, %v312
        %v388 = vpop.permute.xlu0 %387
        %389 = vset.pattern.permute.xlu0 1
        %390 = vperm.xlu0 %389, %v313
        %v391 = vpop.permute.xlu0 %390
        %392 = vset.pattern.permute.xlu0 1
        %393 = vperm.xlu0 %392, %v314
        %v394 = vpop.permute.xlu0 %393
        %395 = vset.pattern.permute.xlu0 1
        %396 = vperm.xlu0 %395, %v315
        %v397 = vpop.permute.xlu0 %396
        %vm398 = vcmp.eq.s32.totalorder %v317, %v376
        %vm399 = vcmp.eq.s32.totalorder %v317, %v379
        %vm400 = vcmp.eq.s32.totalorder %v317, %v382
        %vm401 = vcmp.eq.s32.totalorder %v317, %v385
        %vm402 = vcmp.eq.s32.totalorder %v317, %v388
        %vm403 = vcmp.eq.s32.totalorder %v317, %v391
        %vm404 = vcmp.eq.s32.totalorder %v317, %v394
        %vm405 = vcmp.eq.s32.totalorder %v317, %v397
        %v406 = vsel %vm398, 1, 0
        %v407 = vsel %vm399, 1, 0
        %v408 = vsel %vm400, 1, 0
        %v409 = vsel %vm401, 1, 0
        %v410 = vsel %vm402, 1, 0
        %v411 = vsel %vm403, 1, 0
        %v412 = vsel %vm404, 1, 0
        %v413 = vsel %vm405, 1, 0
        %v414 = vcvt.s32.f32 %v406
        %v415 = vcvt.s32.f32 %v407
        %v416 = vcvt.s32.f32 %v408
        %v417 = vcvt.s32.f32 %v409
        %v418 = vcvt.s32.f32 %v410
        %v419 = vcvt.s32.f32 %v411
        %v420 = vcvt.s32.f32 %v412
        %v421 = vcvt.s32.f32 %v413
        %v422 = vadd.f32 %v366, %v414
        %v423 = vadd.f32 %v367, %v415
        %v424 = vadd.f32 %v368, %v416
        %v425 = vadd.f32 %v369, %v417
        %v426 = vadd.f32 %v370, %v418
        %v427 = vadd.f32 %v371, %v419
        %v428 = vadd.f32 %v372, %v420
        %v429 = vadd.f32 %v373, %v421
        %430 = vset.pattern.permute.xlu0 2
        %431 = vperm.xlu0 %430, %v308
        %v432 = vpop.permute.xlu0 %431
        %433 = vset.pattern.permute.xlu0 2
        %434 = vperm.xlu0 %433, %v309
        %v435 = vpop.permute.xlu0 %434
        %436 = vset.pattern.permute.xlu0 2
        %437 = vperm.xlu0 %436, %v310
        %v438 = vpop.permute.xlu0 %437
        %439 = vset.pattern.permute.xlu0 2
        %440 = vperm.xlu0 %439, %v311
        %v441 = vpop.permute.xlu0 %440
        %442 = vset.pattern.permute.xlu0 2
        %443 = vperm.xlu0 %442, %v312
        %v444 = vpop.permute.xlu0 %443
        %445 = vset.pattern.permute.xlu0 2
        %446 = vperm.xlu0 %445, %v313
        %v447 = vpop.permute.xlu0 %446
        %448 = vset.pattern.permute.xlu0 2
        %449 = vperm.xlu0 %448, %v314
        %v450 = vpop.permute.xlu0 %449
        %451 = vset.pattern.permute.xlu0 2
        %452 = vperm.xlu0 %451, %v315
        %v453 = vpop.permute.xlu0 %452
        %vm454 = vcmp.eq.s32.totalorder %v317, %v432
        %vm455 = vcmp.eq.s32.totalorder %v317, %v435
        %vm456 = vcmp.eq.s32.totalorder %v317, %v438
        %vm457 = vcmp.eq.s32.totalorder %v317, %v441
        %vm458 = vcmp.eq.s32.totalorder %v317, %v444
        %vm459 = vcmp.eq.s32.totalorder %v317, %v447
        %vm460 = vcmp.eq.s32.totalorder %v317, %v450
        %vm461 = vcmp.eq.s32.totalorder %v317, %v453
        %v462 = vsel %vm454, 1, 0
        %v463 = vsel %vm455, 1, 0
        %v464 = vsel %vm456, 1, 0
        %v465 = vsel %vm457, 1, 0
        %v466 = vsel %vm458, 1, 0
        %v467 = vsel %vm459, 1, 0
        %v468 = vsel %vm460, 1, 0
        %v469 = vsel %vm461, 1, 0
        %v470 = vcvt.s32.f32 %v462
        %v471 = vcvt.s32.f32 %v463
        %v472 = vcvt.s32.f32 %v464
        %v473 = vcvt.s32.f32 %v465
        %v474 = vcvt.s32.f32 %v466
        %v475 = vcvt.s32.f32 %v467
        %v476 = vcvt.s32.f32 %v468
        %v477 = vcvt.s32.f32 %v469
        %v478 = vadd.f32 %v422, %v470
        %v479 = vadd.f32 %v423, %v471
        %v480 = vadd.f32 %v424, %v472
        %v481 = vadd.f32 %v425, %v473
        %v482 = vadd.f32 %v426, %v474
        %v483 = vadd.f32 %v427, %v475
        %v484 = vadd.f32 %v428, %v476
        %v485 = vadd.f32 %v429, %v477
        %486 = vset.pattern.permute.xlu0 3
        %487 = vperm.xlu0 %486, %v308
        %v488 = vpop.permute.xlu0 %487
        %489 = vset.pattern.permute.xlu0 3
        %490 = vperm.xlu0 %489, %v309
        %v491 = vpop.permute.xlu0 %490
        %492 = vset.pattern.permute.xlu0 3
        %493 = vperm.xlu0 %492, %v310
        %v494 = vpop.permute.xlu0 %493
        %495 = vset.pattern.permute.xlu0 3
        %496 = vperm.xlu0 %495, %v311
        %v497 = vpop.permute.xlu0 %496
        %498 = vset.pattern.permute.xlu0 3
        %499 = vperm.xlu0 %498, %v312
        %v500 = vpop.permute.xlu0 %499
        %501 = vset.pattern.permute.xlu0 3
        %502 = vperm.xlu0 %501, %v313
        %v503 = vpop.permute.xlu0 %502
        %504 = vset.pattern.permute.xlu0 3
        %505 = vperm.xlu0 %504, %v314
        %v506 = vpop.permute.xlu0 %505
        %507 = vset.pattern.permute.xlu0 3
        %508 = vperm.xlu0 %507, %v315
        %v509 = vpop.permute.xlu0 %508
        %vm510 = vcmp.eq.s32.totalorder %v317, %v488
        %vm511 = vcmp.eq.s32.totalorder %v317, %v491
        %vm512 = vcmp.eq.s32.totalorder %v317, %v494
        %vm513 = vcmp.eq.s32.totalorder %v317, %v497
        %vm514 = vcmp.eq.s32.totalorder %v317, %v500
        %vm515 = vcmp.eq.s32.totalorder %v317, %v503
        %vm516 = vcmp.eq.s32.totalorder %v317, %v506
        %vm517 = vcmp.eq.s32.totalorder %v317, %v509
        %v518 = vsel %vm510, 1, 0
        %v519 = vsel %vm511, 1, 0
        %v520 = vsel %vm512, 1, 0
        %v521 = vsel %vm513, 1, 0
        %v522 = vsel %vm514, 1, 0
        %v523 = vsel %vm515, 1, 0
        %v524 = vsel %vm516, 1, 0
        %v525 = vsel %vm517, 1, 0
        %v526 = vcvt.s32.f32 %v518
        %v527 = vcvt.s32.f32 %v519
        %v528 = vcvt.s32.f32 %v520
        %v529 = vcvt.s32.f32 %v521
        %v530 = vcvt.s32.f32 %v522
        %v531 = vcvt.s32.f32 %v523
        %v532 = vcvt.s32.f32 %v524
        %v533 = vcvt.s32.f32 %v525
        %v534 = vadd.f32 %v478, %v526
        %v535 = vadd.f32 %v479, %v527
        %v536 = vadd.f32 %v480, %v528
        %v537 = vadd.f32 %v481, %v529
        %v538 = vadd.f32 %v482, %v530
        %v539 = vadd.f32 %v483, %v531
        %v540 = vadd.f32 %v484, %v532
        %v541 = vadd.f32 %v485, %v533
        %542 = vset.pattern.permute.xlu0 4
        %543 = vperm.xlu0 %542, %v308
        %v544 = vpop.permute.xlu0 %543
        %545 = vset.pattern.permute.xlu0 4
        %546 = vperm.xlu0 %545, %v309
        %v547 = vpop.permute.xlu0 %546
        %548 = vset.pattern.permute.xlu0 4
        %549 = vperm.xlu0 %548, %v310
        %v550 = vpop.permute.xlu0 %549
        %551 = vset.pattern.permute.xlu0 4
        %552 = vperm.xlu0 %551, %v311
        %v553 = vpop.permute.xlu0 %552
        %554 = vset.pattern.permute.xlu0 4
        %555 = vperm.xlu0 %554, %v312
        %v556 = vpop.permute.xlu0 %555
        %557 = vset.pattern.permute.xlu0 4
        %558 = vperm.xlu0 %557, %v313
        %v559 = vpop.permute.xlu0 %558
        %560 = vset.pattern.permute.xlu0 4
        %561 = vperm.xlu0 %560, %v314
        %v562 = vpop.permute.xlu0 %561
        %563 = vset.pattern.permute.xlu0 4
        %564 = vperm.xlu0 %563, %v315
        %v565 = vpop.permute.xlu0 %564
        %vm566 = vcmp.eq.s32.totalorder %v317, %v544
        %vm567 = vcmp.eq.s32.totalorder %v317, %v547
        %vm568 = vcmp.eq.s32.totalorder %v317, %v550
        %vm569 = vcmp.eq.s32.totalorder %v317, %v553
        %vm570 = vcmp.eq.s32.totalorder %v317, %v556
        %vm571 = vcmp.eq.s32.totalorder %v317, %v559
        %vm572 = vcmp.eq.s32.totalorder %v317, %v562
        %vm573 = vcmp.eq.s32.totalorder %v317, %v565
        %v574 = vsel %vm566, 1, 0
        %v575 = vsel %vm567, 1, 0
        %v576 = vsel %vm568, 1, 0
        %v577 = vsel %vm569, 1, 0
        %v578 = vsel %vm570, 1, 0
        %v579 = vsel %vm571, 1, 0
        %v580 = vsel %vm572, 1, 0
        %v581 = vsel %vm573, 1, 0
        %v582 = vcvt.s32.f32 %v574
        %v583 = vcvt.s32.f32 %v575
        %v584 = vcvt.s32.f32 %v576
        %v585 = vcvt.s32.f32 %v577
        %v586 = vcvt.s32.f32 %v578
        %v587 = vcvt.s32.f32 %v579
        %v588 = vcvt.s32.f32 %v580
        %v589 = vcvt.s32.f32 %v581
        %v590 = vadd.f32 %v534, %v582
        %v591 = vadd.f32 %v535, %v583
        %v592 = vadd.f32 %v536, %v584
        %v593 = vadd.f32 %v537, %v585
        %v594 = vadd.f32 %v538, %v586
        %v595 = vadd.f32 %v539, %v587
        %v596 = vadd.f32 %v540, %v588
        %v597 = vadd.f32 %v541, %v589
        %598 = vset.pattern.permute.xlu0 5
        %599 = vperm.xlu0 %598, %v308
        %v600 = vpop.permute.xlu0 %599
        %601 = vset.pattern.permute.xlu0 5
        %602 = vperm.xlu0 %601, %v309
        %v603 = vpop.permute.xlu0 %602
        %604 = vset.pattern.permute.xlu0 5
        %605 = vperm.xlu0 %604, %v310
        %v606 = vpop.permute.xlu0 %605
        %607 = vset.pattern.permute.xlu0 5
        %608 = vperm.xlu0 %607, %v311
        %v609 = vpop.permute.xlu0 %608
        %610 = vset.pattern.permute.xlu0 5
        %611 = vperm.xlu0 %610, %v312
        %v612 = vpop.permute.xlu0 %611
        %613 = vset.pattern.permute.xlu0 5
        %614 = vperm.xlu0 %613, %v313
        %v615 = vpop.permute.xlu0 %614
        %616 = vset.pattern.permute.xlu0 5
        %617 = vperm.xlu0 %616, %v314
        %v618 = vpop.permute.xlu0 %617
        %619 = vset.pattern.permute.xlu0 5
        %620 = vperm.xlu0 %619, %v315
        %v621 = vpop.permute.xlu0 %620
        %vm622 = vcmp.eq.s32.totalorder %v317, %v600
        %vm623 = vcmp.eq.s32.totalorder %v317, %v603
        %vm624 = vcmp.eq.s32.totalorder %v317, %v606
        %vm625 = vcmp.eq.s32.totalorder %v317, %v609
        %vm626 = vcmp.eq.s32.totalorder %v317, %v612
        %vm627 = vcmp.eq.s32.totalorder %v317, %v615
        %vm628 = vcmp.eq.s32.totalorder %v317, %v618
        %vm629 = vcmp.eq.s32.totalorder %v317, %v621
        %v630 = vsel %vm622, 1, 0
        %v631 = vsel %vm623, 1, 0
        %v632 = vsel %vm624, 1, 0
        %v633 = vsel %vm625, 1, 0
        %v634 = vsel %vm626, 1, 0
        %v635 = vsel %vm627, 1, 0
        %v636 = vsel %vm628, 1, 0
        %v637 = vsel %vm629, 1, 0
        %v638 = vcvt.s32.f32 %v630
        %v639 = vcvt.s32.f32 %v631
        %v640 = vcvt.s32.f32 %v632
        %v641 = vcvt.s32.f32 %v633
        %v642 = vcvt.s32.f32 %v634
        %v643 = vcvt.s32.f32 %v635
        %v644 = vcvt.s32.f32 %v636
        %v645 = vcvt.s32.f32 %v637
        %v646 = vadd.f32 %v590, %v638
        %v647 = vadd.f32 %v591, %v639
        %v648 = vadd.f32 %v592, %v640
        %v649 = vadd.f32 %v593, %v641
        %v650 = vadd.f32 %v594, %v642
        %v651 = vadd.f32 %v595, %v643
        %v652 = vadd.f32 %v596, %v644
        %v653 = vadd.f32 %v597, %v645
        %v654 = vpack.c.bf16 %v647, %v646
        %v655 = vpack.c.bf16 %v649, %v648
        %v656 = vpack.c.bf16 %v651, %v650
        %v657 = vpack.c.bf16 %v653, %v652
        %v658 = vld [vmem:[%s306] sm:$0xff]
        %659 = vset.pattern.permute.xlu0 0
        %660 = vperm.xlu0 %659, %v658
        %v661 = vpop.permute.xlu0 %660
        %vm662 = vcmp.eq.s32.totalorder %v317, %v661
        %v663 = vsel %vm662, 1, 0
        %v664 = vcvt.s32.f32 %v663
        %v665 = vadd.f32 %v664, 0.0
        %666 = vset.pattern.permute.xlu0 1
        %667 = vperm.xlu0 %666, %v658
        %v668 = vpop.permute.xlu0 %667
        %vm669 = vcmp.eq.s32.totalorder %v317, %v668
        %v670 = vsel %vm669, 1, 0
        %v671 = vcvt.s32.f32 %v670
        %v672 = vadd.f32 %v665, %v671
        %673 = vset.pattern.permute.xlu0 2
        %674 = vperm.xlu0 %673, %v658
        %v675 = vpop.permute.xlu0 %674
        %vm676 = vcmp.eq.s32.totalorder %v317, %v675
        %v677 = vsel %vm676, 1, 0
        %v678 = vcvt.s32.f32 %v677
        %v679 = vadd.f32 %v672, %v678
        %680 = vset.pattern.permute.xlu0 3
        %681 = vperm.xlu0 %680, %v658
        %v682 = vpop.permute.xlu0 %681
        %vm683 = vcmp.eq.s32.totalorder %v317, %v682
        %v684 = vsel %vm683, 1, 0
        %v685 = vcvt.s32.f32 %v684
        %v686 = vadd.f32 %v679, %v685
        %687 = vset.pattern.permute.xlu0 4
        %688 = vperm.xlu0 %687, %v658
        %v689 = vpop.permute.xlu0 %688
        %vm690 = vcmp.eq.s32.totalorder %v317, %v689
        %v691 = vsel %vm690, 1, 0
        %v692 = vcvt.s32.f32 %v691
        %v693 = vadd.f32 %v686, %v692
        %v694 = vpack.c.bf16 %v693, %v693
        %v695 = vld [vmem:[%s2] sm:$0xf]
        %v696 = vld [vmem:[%s2 + $0x4] sm:$0xf]
        %v697 = vld [vmem:[%s2 + $0x8] sm:$0xf]
        %v698 = vld [vmem:[%s2 + $0xc] sm:$0xf]
        %v699 = vld [vmem:[%s2 + $0x10] sm:$0xf]
        %v700 = vld [vmem:[%s2 + $0x14] sm:$0xf]
        %v701 = vld [vmem:[%s2 + $0x18] sm:$0xf]
        %v702 = vld [vmem:[%s2 + $0x1c] sm:$0xf]
        %v703 = vld [vmem:[%s2 + $0x20] sm:$0xf]
        %v704 = vld [vmem:[%s2 + $0x24] sm:$0xf]
        %v705 = vld [vmem:[%s2 + $0x28] sm:$0xf]
        %v706 = vld [vmem:[%s2 + $0x2c] sm:$0xf]
        %v707 = vld [vmem:[%s2 + $0x30] sm:$0xf]
        %v708 = vld [vmem:[%s2 + $0x34] sm:$0xf]
        %v709 = vld [vmem:[%s2 + $0x38] sm:$0xf]
        %v710 = vld [vmem:[%s2 + $0x3c] sm:$0xf]
        %v727 = vunpack.c.l.b16 %v695
        %v728 = vunpack.c.l.b16 %v696
        %v729 = vunpack.c.l.b16 %v697
        %v730 = vunpack.c.l.b16 %v698
        %v731 = vunpack.c.l.b16 %v699
        %v732 = vunpack.c.l.b16 %v700
        %v733 = vunpack.c.l.b16 %v701
        %v734 = vunpack.c.l.b16 %v702
        %v735 = vunpack.c.l.b16 %v703
        %v736 = vunpack.c.l.b16 %v704
        %v737 = vunpack.c.l.b16 %v705
        %v738 = vunpack.c.l.b16 %v706
        %v739 = vunpack.c.l.b16 %v707
        %v740 = vunpack.c.l.b16 %v708
        %v741 = vunpack.c.l.b16 %v709
        %v742 = vunpack.c.l.b16 %v710
        %v743 = vpack.c.b16 %v728, %v727
        %v744 = vpack.c.b16 %v730, %v729
        %v745 = vpack.c.b16 %v732, %v731
        %v746 = vpack.c.b16 %v734, %v733
        %v747 = vpack.c.b16 %v736, %v735
        %v748 = vpack.c.b16 %v738, %v737
        %v749 = vpack.c.b16 %v740, %v739
        %v750 = vpack.c.b16 %v742, %v741
        %759 = vmatprep.subr.bf16.mxu0 0
        %760 = vmatpush1.bf16.msra.mxu0 %v743
        %761 = vmatprep.subr.bf16.mxu0 0
        %762 = vmatpush1.bf16.msra.mxu0 %v744
        %763 = vmatprep.subr.bf16.mxu0 0
        %764 = vmatpush1.bf16.msra.mxu0 %v745
        %765 = vmatprep.subr.bf16.mxu0 0
        %766 = vmatpush1.bf16.msra.mxu0 %v746
        %767 = vmatprep.subr.bf16.mxu0 0
        %768 = vmatpush1.bf16.msra.mxu0 %v747
        %769 = vmatprep.subr.bf16.mxu0 0
        %770 = vmatpush1.bf16.msra.mxu0 %v748
        %771 = vmatprep.subr.bf16.mxu0 0
        %772 = vmatpush1.bf16.msra.mxu0 %v749
        %773 = vmatprep.subr.bf16.mxu0 0
        %774 = vmatpush1.bf16.msra.mxu0 %v750
        %775 = vmatprep.subr.bf16.mxu0 0
        %776 = vmatpush1.bf16.msra.mxu0 0
        %777 = vmatprep.subr.bf16.mxu0 0
        %778 = vmatpush1.bf16.msra.mxu0 0
        %779 = vmatprep.subr.bf16.mxu0 0
        %780 = vmatpush1.bf16.msra.mxu0 0
        %781 = vmatprep.subr.bf16.mxu0 0
        %782 = vmatpush1.bf16.msra.mxu0 0
        %783 = vmatprep.subr.bf16.mxu0 0
        %784 = vmatpush1.bf16.msra.mxu0 0
        %785 = vmatprep.subr.bf16.mxu0 0
        %786 = vmatpush1.bf16.msra.mxu0 0
        %787 = vmatprep.subr.bf16.mxu0 0
        %788 = vmatpush1.bf16.msra.mxu0 0
        %789 = vmatprep.subr.bf16.mxu0 0
        %790 = vmatpush1.bf16.msra.mxu0 0
        %791 = vmatprep.mubr.bf16.mxu0 0
        %792 = vmatmul.mubr.bf16.gmra.mrb[0].mxu0 %v654
        %v793 = vpop.f32.mrb[0].mxu0
        %v794 = vadd.f32 0.0, %v793
        %v795 = vpop.f32.mrb[0].mxu0
        %v796 = vpop.f32.mrb[0].mxu0
        %v797 = vadd.f32 0.0, %v796
        %v798 = vpop.f32.mrb[0].mxu0
        %799 = vmatprep.mubr.bf16.mxu0 0
        %800 = vmatmul.mubr.bf16.gmra.mrb[0].mxu0 %v655
        %v801 = vpop.f32.mrb[0].mxu0
        %v802 = vadd.f32 0.0, %v801
        %v803 = vpop.f32.mrb[0].mxu0
        %v804 = vpop.f32.mrb[0].mxu0
        %v805 = vadd.f32 0.0, %v804
        %v806 = vpop.f32.mrb[0].mxu0
        %807 = vmatprep.mubr.bf16.mxu0 0
        %808 = vmatmul.mubr.bf16.gmra.mrb[0].mxu0 %v656
        %v809 = vpop.f32.mrb[0].mxu0
        %v810 = vadd.f32 0.0, %v809
        %v811 = vpop.f32.mrb[0].mxu0
        %v812 = vpop.f32.mrb[0].mxu0
        %v813 = vadd.f32 0.0, %v812
        %v814 = vpop.f32.mrb[0].mxu0
        %815 = vmatprep.mubr.bf16.mxu0 0
        %816 = vmatmul.mubr.bf16.gmra.mrb[0].mxu0 %v657
        %v817 = vpop.f32.mrb[0].mxu0
        %v818 = vadd.f32 0.0, %v817
        %v819 = vpop.f32.mrb[0].mxu0
        %v820 = vpop.f32.mrb[0].mxu0
        %v821 = vadd.f32 0.0, %v820
        %v822 = vpop.f32.mrb[0].mxu0
        %823 = vdwg.mxu0
        %v824 = vld [vmem:[%s4] sm:$0xff]
        %v825 = vadd.f32 %v794, %v824
        %v826 = vadd.f32 %v797, %v824
        %v827 = vadd.f32 %v802, %v824
        %v828 = vadd.f32 %v805, %v824
        %v829 = vadd.f32 %v810, %v824
        %v830 = vadd.f32 %v813, %v824
        %v831 = vadd.f32 %v818, %v824
        %v832 = vadd.f32 %v821, %v824
        %v833 = vld [vmem:[%s3] sm:$0xf]
        %v834 = vld [vmem:[%s3 + $0x4] sm:$0xf]
        %v835 = vld [vmem:[%s3 + $0x8] sm:$0xf]
        %v836 = vld [vmem:[%s3 + $0xc] sm:$0xf]
        %v837 = vld [vmem:[%s3 + $0x10] sm:$0xf]
        %v838 = vld [vmem:[%s3 + $0x14] sm:$0xf]
        %v839 = vld [vmem:[%s3 + $0x18] sm:$0xf]
        %v840 = vld [vmem:[%s3 + $0x1c] sm:$0xf]
        %v841 = vld [vmem:[%s3 + $0x20] sm:$0xf]
        %v842 = vld [vmem:[%s3 + $0x24] sm:$0xf]
        %v843 = vld [vmem:[%s3 + $0x28] sm:$0xf]
        %v844 = vld [vmem:[%s3 + $0x2c] sm:$0xf]
        %v845 = vld [vmem:[%s3 + $0x30] sm:$0xf]
        %v846 = vld [vmem:[%s3 + $0x34] sm:$0xf]
        %v847 = vld [vmem:[%s3 + $0x38] sm:$0xf]
        %v848 = vld [vmem:[%s3 + $0x3c] sm:$0xf]
        %v865 = vunpack.c.l.b16 %v833
        %v866 = vunpack.c.l.b16 %v834
        %v867 = vunpack.c.l.b16 %v835
        %v868 = vunpack.c.l.b16 %v836
        %v869 = vunpack.c.l.b16 %v837
        %v870 = vunpack.c.l.b16 %v838
        %v871 = vunpack.c.l.b16 %v839
        %v872 = vunpack.c.l.b16 %v840
        %v873 = vunpack.c.l.b16 %v841
        %v874 = vunpack.c.l.b16 %v842
        %v875 = vunpack.c.l.b16 %v843
        %v876 = vunpack.c.l.b16 %v844
        %v877 = vunpack.c.l.b16 %v845
        %v878 = vunpack.c.l.b16 %v846
        %v879 = vunpack.c.l.b16 %v847
        %v880 = vunpack.c.l.b16 %v848
        %v881 = vpack.c.b16 %v866, %v865
        %v882 = vpack.c.b16 %v868, %v867
        %v883 = vpack.c.b16 %v870, %v869
        %v884 = vpack.c.b16 %v872, %v871
        %v885 = vpack.c.b16 %v874, %v873
        %v886 = vpack.c.b16 %v876, %v875
        %v887 = vpack.c.b16 %v878, %v877
        %v888 = vpack.c.b16 %v880, %v879
        %897 = vmatprep.subr.bf16.mxu0 0
        %898 = vmatpush1.bf16.msra.mxu0 %v881
        %899 = vmatprep.subr.bf16.mxu0 0
        %900 = vmatpush1.bf16.msra.mxu0 %v882
        %901 = vmatprep.subr.bf16.mxu0 0
        %902 = vmatpush1.bf16.msra.mxu0 %v883
        %903 = vmatprep.subr.bf16.mxu0 0
        %904 = vmatpush1.bf16.msra.mxu0 %v884
        %905 = vmatprep.subr.bf16.mxu0 0
        %906 = vmatpush1.bf16.msra.mxu0 %v885
        %907 = vmatprep.subr.bf16.mxu0 0
        %908 = vmatpush1.bf16.msra.mxu0 %v886
        %909 = vmatprep.subr.bf16.mxu0 0
        %910 = vmatpush1.bf16.msra.mxu0 %v887
        %911 = vmatprep.subr.bf16.mxu0 0
        %912 = vmatpush1.bf16.msra.mxu0 %v888
        %913 = vmatprep.subr.bf16.mxu0 0
        %914 = vmatpush1.bf16.msra.mxu0 0
        %915 = vmatprep.subr.bf16.mxu0 0
        %916 = vmatpush1.bf16.msra.mxu0 0
        %917 = vmatprep.subr.bf16.mxu0 0
        %918 = vmatpush1.bf16.msra.mxu0 0
        %919 = vmatprep.subr.bf16.mxu0 0
        %920 = vmatpush1.bf16.msra.mxu0 0
        %921 = vmatprep.subr.bf16.mxu0 0
        %922 = vmatpush1.bf16.msra.mxu0 0
        %923 = vmatprep.subr.bf16.mxu0 0
        %924 = vmatpush1.bf16.msra.mxu0 0
        %925 = vmatprep.subr.bf16.mxu0 0
        %926 = vmatpush1.bf16.msra.mxu0 0
        %927 = vmatprep.subr.bf16.mxu0 0
        %928 = vmatpush1.bf16.msra.mxu0 0
        %929 = vmatprep.mubr.bf16.mxu0 0
        %930 = vmatmul.mubr.bf16.gmra.mrb[0].mxu0 %v694
        %v931 = vpop.f32.mrb[0].mxu0
        %v932 = vadd.f32 0.0, %v931
        %v933 = vpop.f32.mrb[0].mxu0
        %v934 = vpop.f32.mrb[0].mxu0
        %v935 = vpop.f32.mrb[0].mxu0
        %936 = vdwg.mxu0
        %v938 = vcombine.high %v932, %v932
        %v940 = vunpack.c.l.s4 1966171168
        %v941 = vunpack.c.0.s8 %v940
        %v942 = vlaneseq
        %v943 = vshrl.u32 %v942, 7
        %v944 = vsub.s32 %v941, %v943
        %v945 = vrot.slane %v932, %v944
        %v947 = vunpack.c.l.s4 1966171168
        %v948 = vunpack.c.0.s8 %v947
        %v949 = vlaneseq
        %v950 = vshrl.u32 %v949, 7
        %v951 = vsub.s32 %v948, %v950
        %v952 = vrot.slane %v938, %v951
        %v953 = vcombine.high %v945, %v945
        %v954 = vcombine.high %v952, %v952
        %v956 = vunpack.c.l.s4 1966171168
        %v957 = vunpack.c.0.s8 %v956
        %v958 = vlaneseq
        %v959 = vshrl.u32 %v958, 7
        %v960 = vsub.s32 %v957, %v959
        %v961 = vrot.slane %v945, %v960
        %v963 = vunpack.c.l.s4 1966171168
        %v964 = vunpack.c.0.s8 %v963
        %v965 = vlaneseq
        %v966 = vshrl.u32 %v965, 7
        %v967 = vsub.s32 %v964, %v966
        %v968 = vrot.slane %v952, %v967
        %v970 = vunpack.c.l.s4 1966171168
        %v971 = vunpack.c.0.s8 %v970
        %v972 = vlaneseq
        %v973 = vshrl.u32 %v972, 7
        %v974 = vsub.s32 %v971, %v973
        %v975 = vrot.slane %v953, %v974
        %v977 = vunpack.c.l.s4 1966171168
        %v978 = vunpack.c.0.s8 %v977
        %v979 = vlaneseq
        %v980 = vshrl.u32 %v979, 7
        %v981 = vsub.s32 %v978, %v980
        %v982 = vrot.slane %v954, %v981
        %v983 = vcombine.high %v961, %v961
        %v984 = vcombine.high %v968, %v968
        %v985 = vcombine.high %v975, %v975
        %v986 = vcombine.high %v982, %v982
        %v987 = vlaneseq
        %v988 = vshrl.u32 %v987, 7
        %v989 = vsub.s32 0, %v988
        %v990 = vrot.slane %v961, %v989
        %v991 = vlaneseq
        %v992 = vshrl.u32 %v991, 7
        %v993 = vsub.s32 0, %v992
        %v994 = vrot.slane %v975, %v993
        %v995 = vlaneseq
        %v996 = vshrl.u32 %v995, 7
        %v997 = vsub.s32 0, %v996
        %v998 = vrot.slane %v983, %v997
        %v999 = vlaneseq
        %v1000 = vshrl.u32 %v999, 7
        %v1001 = vsub.s32 0, %v1000
        %v1002 = vrot.slane %v985, %v1001
        %v1003 = vlaneseq
        %v1004 = vshrl.u32 %v1003, 7
        %v1005 = vsub.s32 0, %v1004
        %v1006 = vrot.slane %v968, %v1005
        %v1007 = vlaneseq
        %v1008 = vshrl.u32 %v1007, 7
        %v1009 = vsub.s32 0, %v1008
        %v1010 = vrot.slane %v982, %v1009
        %v1011 = vlaneseq
        %v1012 = vshrl.u32 %v1011, 7
        %v1013 = vsub.s32 0, %v1012
        %v1014 = vrot.slane %v984, %v1013
        %v1015 = vlaneseq
        %v1016 = vshrl.u32 %v1015, 7
        %v1017 = vsub.s32 0, %v1016
        %v1018 = vrot.slane %v986, %v1017
        %v1027 = vmul.f32 %v825, %v990
        %v1028 = vmul.f32 %v826, %v994
        %v1029 = vmul.f32 %v827, %v998
        %v1030 = vmul.f32 %v828, %v1002
        %v1031 = vmul.f32 %v829, %v1006
        %v1032 = vmul.f32 %v830, %v1010
        %v1033 = vmul.f32 %v831, %v1014
        %v1034 = vmul.f32 %v832, %v1018
        %vm1035 = vcmask 261120
        %v1036 = vsel %vm1035, %v1027, 0.0
        %1037 = vadd.xlane.f32.xlu0 %v1036
        %v1038 = vpop.xlane.xlu0 %1037
        %v1039 = vsel %vm1035, %v1028, 0.0
        %1040 = vadd.xlane.f32.xlu0 %v1039
        %v1041 = vpop.xlane.xlu0 %1040
        %v1042 = vsel %vm1035, %v1029, 0.0
        %1043 = vadd.xlane.f32.xlu0 %v1042
        %v1044 = vpop.xlane.xlu0 %1043
        %v1045 = vsel %vm1035, %v1030, 0.0
        %1046 = vadd.xlane.f32.xlu0 %v1045
        %v1047 = vpop.xlane.xlu0 %1046
        %v1048 = vsel %vm1035, %v1031, 0.0
        %1049 = vadd.xlane.f32.xlu0 %v1048
        %v1050 = vpop.xlane.xlu0 %1049
        %v1051 = vsel %vm1035, %v1032, 0.0
        %1052 = vadd.xlane.f32.xlu0 %v1051
        %v1053 = vpop.xlane.xlu0 %1052
        %v1054 = vsel %vm1035, %v1033, 0.0
        %1055 = vadd.xlane.f32.xlu0 %v1054
        %v1056 = vpop.xlane.xlu0 %1055
        %v1057 = vsel %vm1035, %v1034, 0.0
        %1058 = vadd.xlane.f32.xlu0 %v1057
        %v1059 = vpop.xlane.xlu0 %1058
        %v1068 = vlaneseq
        %v1069 = vshrl.u32 %v1068, 7
        %v1070 = vsub.s32 %v317, %v1069
        %v1071 = vrot.slane %v1038, %v1070
        %v1072 = vlaneseq
        %v1073 = vshrl.u32 %v1072, 7
        %v1074 = vsub.s32 %v317, %v1073
        %v1075 = vrot.slane %v1041, %v1074
        %v1076 = vlaneseq
        %v1077 = vshrl.u32 %v1076, 7
        %v1078 = vsub.s32 %v317, %v1077
        %v1079 = vrot.slane %v1044, %v1078
        %v1080 = vlaneseq
        %v1081 = vshrl.u32 %v1080, 7
        %v1082 = vsub.s32 %v317, %v1081
        %v1083 = vrot.slane %v1047, %v1082
        %v1084 = vlaneseq
        %v1085 = vshrl.u32 %v1084, 7
        %v1086 = vsub.s32 %v317, %v1085
        %v1087 = vrot.slane %v1050, %v1086
        %v1088 = vlaneseq
        %v1089 = vshrl.u32 %v1088, 7
        %v1090 = vsub.s32 %v317, %v1089
        %v1091 = vrot.slane %v1053, %v1090
        %v1092 = vlaneseq
        %v1093 = vshrl.u32 %v1092, 7
        %v1094 = vsub.s32 %v317, %v1093
        %v1095 = vrot.slane %v1056, %v1094
        %v1096 = vlaneseq
        %v1097 = vshrl.u32 %v1096, 7
        %v1098 = vsub.s32 %v317, %v1097
        %v1099 = vrot.slane %v1059, %v1098
        %vm1100 = vcmask 1041409
        %v1101 = vsel %vm1100, %v1075, %v1071
        %vm1102 = vcmask 1042434
        %v1103 = vsel %vm1102, %v1079, %v1101
        %vm1104 = vcmask 1043459
        %v1105 = vsel %vm1104, %v1083, %v1103
        %vm1106 = vcmask 1044484
        %v1107 = vsel %vm1106, %v1087, %v1105
        %vm1108 = vcmask 1045509
        %v1109 = vsel %vm1108, %v1091, %v1107
        %vm1110 = vcmask 1046534
        %v1111 = vsel %vm1110, %v1095, %v1109
        %vm1112 = vcmask 1047559
        %v1113 = vsel %vm1112, %v1099, %v1111
        %vm1115 = vcmask 64512
        %v1116 = vsel %vm1115, %v1113, -inf
        %1117 = vmax.xlane.f32.xlu0 %v1116
        %v1118 = vpop.xlane.xlu0 %1117
        %v1120 = vlaneseq
        %v1121 = vshrl.u32 %v1120, 7
        %v1122 = vsub.s32 0, %v1121
        %v1123 = vrot.slane %v1118, %v1122
        %v1124 = vlaneseq
        %v1125 = vshrl.u32 %v1124, 7
        %v1126 = vsub.s32 1, %v1125
        %v1127 = vrot.slane %v1118, %v1126
        %v1128 = vlaneseq
        %v1129 = vshrl.u32 %v1128, 7
        %v1130 = vsub.s32 2, %v1129
        %v1131 = vrot.slane %v1118, %v1130
        %v1132 = vlaneseq
        %v1133 = vshrl.u32 %v1132, 7
        %v1134 = vsub.s32 3, %v1133
        %v1135 = vrot.slane %v1118, %v1134
        %v1136 = vlaneseq
        %v1137 = vshrl.u32 %v1136, 7
        %v1138 = vsub.s32 4, %v1137
        %v1139 = vrot.slane %v1118, %v1138
        %v1140 = vlaneseq
        %v1141 = vshrl.u32 %v1140, 7
        %v1142 = vsub.s32 5, %v1141
        %v1143 = vrot.slane %v1118, %v1142
        %v1144 = vlaneseq
        %v1145 = vshrl.u32 %v1144, 7
        %v1146 = vsub.s32 6, %v1145
        %v1147 = vrot.slane %v1118, %v1146
        %v1148 = vlaneseq
        %v1149 = vshrl.u32 %v1148, 7
        %v1150 = vsub.s32 7, %v1149
        %v1151 = vrot.slane %v1118, %v1150
        %v1160 = vsub.f32 %v1038, %v1123
        %v1161 = vsub.f32 %v1041, %v1127
        %v1162 = vsub.f32 %v1044, %v1131
        %v1163 = vsub.f32 %v1047, %v1135
        %v1164 = vsub.f32 %v1050, %v1139
        %v1165 = vsub.f32 %v1053, %v1143
        %v1166 = vsub.f32 %v1056, %v1147
        %v1167 = vsub.f32 %v1059, %v1151
        %v1168 = vmul.f32 %v1160, 1.442695
        %v1169 = vpow.pop %v1168
        %v1170 = vmul.f32 %v1161, 1.442695
        %v1171 = vpow.pop %v1170
        %v1172 = vmul.f32 %v1162, 1.442695
        %v1173 = vpow.pop %v1172
        %v1174 = vmul.f32 %v1163, 1.442695
        %v1175 = vpow.pop %v1174
        %v1176 = vmul.f32 %v1164, 1.442695
        %v1177 = vpow.pop %v1176
        %v1178 = vmul.f32 %v1165, 1.442695
        %v1179 = vpow.pop %v1178
        %v1180 = vmul.f32 %v1166, 1.442695
        %v1181 = vpow.pop %v1180
        %v1182 = vmul.f32 %v1167, 1.442695
        %v1183 = vpow.pop %v1182
        %1192 = vset.pattern.permute.xlu0 0
        %1193 = vperm.xlu0 %1192, %v1169
        %v1194 = vpop.permute.xlu0 %1193
        %1195 = vset.pattern.permute.xlu0 0
        %1196 = vperm.xlu0 %1195, %v1171
        %v1197 = vpop.permute.xlu0 %1196
        %1198 = vset.pattern.permute.xlu0 0
        %1199 = vperm.xlu0 %1198, %v1173
        %v1200 = vpop.permute.xlu0 %1199
        %1201 = vset.pattern.permute.xlu0 0
        %1202 = vperm.xlu0 %1201, %v1175
        %v1203 = vpop.permute.xlu0 %1202
        %1204 = vset.pattern.permute.xlu0 0
        %1205 = vperm.xlu0 %1204, %v1177
        %v1206 = vpop.permute.xlu0 %1205
        %1207 = vset.pattern.permute.xlu0 0
        %1208 = vperm.xlu0 %1207, %v1179
        %v1209 = vpop.permute.xlu0 %1208
        %1210 = vset.pattern.permute.xlu0 0
        %1211 = vperm.xlu0 %1210, %v1181
        %v1212 = vpop.permute.xlu0 %1211
        %1213 = vset.pattern.permute.xlu0 0
        %1214 = vperm.xlu0 %1213, %v1183
        %v1215 = vpop.permute.xlu0 %1214
        %v1216 = vlaneseq
        %v1217 = vshrl.u32 %v1216, 7
        %v1218 = vsub.s32 %v317, %v1217
        %v1219 = vrot.slane %v1194, %v1218
        %v1220 = vlaneseq
        %v1221 = vshrl.u32 %v1220, 7
        %v1222 = vsub.s32 %v317, %v1221
        %v1223 = vrot.slane %v1197, %v1222
        %v1224 = vlaneseq
        %v1225 = vshrl.u32 %v1224, 7
        %v1226 = vsub.s32 %v317, %v1225
        %v1227 = vrot.slane %v1200, %v1226
        %v1228 = vlaneseq
        %v1229 = vshrl.u32 %v1228, 7
        %v1230 = vsub.s32 %v317, %v1229
        %v1231 = vrot.slane %v1203, %v1230
        %v1232 = vlaneseq
        %v1233 = vshrl.u32 %v1232, 7
        %v1234 = vsub.s32 %v317, %v1233
        %v1235 = vrot.slane %v1206, %v1234
        %v1236 = vlaneseq
        %v1237 = vshrl.u32 %v1236, 7
        %v1238 = vsub.s32 %v317, %v1237
        %v1239 = vrot.slane %v1209, %v1238
        %v1240 = vlaneseq
        %v1241 = vshrl.u32 %v1240, 7
        %v1242 = vsub.s32 %v317, %v1241
        %v1243 = vrot.slane %v1212, %v1242
        %v1244 = vlaneseq
        %v1245 = vshrl.u32 %v1244, 7
        %v1246 = vsub.s32 %v317, %v1245
        %v1247 = vrot.slane %v1215, %v1246
        %v1248 = vsel %vm1100, %v1223, %v1219
        %v1249 = vsel %vm1102, %v1227, %v1248
        %v1250 = vsel %vm1104, %v1231, %v1249
        %v1251 = vsel %vm1106, %v1235, %v1250
        %v1252 = vsel %vm1108, %v1239, %v1251
        %v1253 = vsel %vm1110, %v1243, %v1252
        %v1254 = vsel %vm1112, %v1247, %v1253
        %v1256 = vsel %vm1115, %v1254, 0.0
        %1257 = vadd.xlane.f32.xlu0 %v1256
        %v1258 = vpop.xlane.xlu0 %1257
        %v1260 = vlaneseq
        %v1261 = vshrl.u32 %v1260, 7
        %v1262 = vsub.s32 0, %v1261
        %v1263 = vrot.slane %v1258, %v1262
        %v1264 = vlaneseq
        %v1265 = vshrl.u32 %v1264, 7
        %v1266 = vsub.s32 1, %v1265
        %v1267 = vrot.slane %v1258, %v1266
        %v1268 = vlaneseq
        %v1269 = vshrl.u32 %v1268, 7
        %v1270 = vsub.s32 2, %v1269
        %v1271 = vrot.slane %v1258, %v1270
        %v1272 = vlaneseq
        %v1273 = vshrl.u32 %v1272, 7
        %v1274 = vsub.s32 3, %v1273
        %v1275 = vrot.slane %v1258, %v1274
        %v1276 = vlaneseq
        %v1277 = vshrl.u32 %v1276, 7
        %v1278 = vsub.s32 4, %v1277
        %v1279 = vrot.slane %v1258, %v1278
        %v1280 = vlaneseq
        %v1281 = vshrl.u32 %v1280, 7
        %v1282 = vsub.s32 5, %v1281
        %v1283 = vrot.slane %v1258, %v1282
        %v1284 = vlaneseq
        %v1285 = vshrl.u32 %v1284, 7
        %v1286 = vsub.s32 6, %v1285
        %v1287 = vrot.slane %v1258, %v1286
        %v1288 = vlaneseq
        %v1289 = vshrl.u32 %v1288, 7
        %v1290 = vsub.s32 7, %v1289
        %v1291 = vrot.slane %v1258, %v1290
        %v1300 = vrcp.pop %v1263
        %v1301 = vmul.f32 %v1169, %v1300
        %v1302 = vrcp.pop %v1267
        %v1303 = vmul.f32 %v1171, %v1302
        %v1304 = vrcp.pop %v1271
        %v1305 = vmul.f32 %v1173, %v1304
        %v1306 = vrcp.pop %v1275
        %v1307 = vmul.f32 %v1175, %v1306
        %v1308 = vrcp.pop %v1279
        %v1309 = vmul.f32 %v1177, %v1308
        %v1310 = vrcp.pop %v1283
        %v1311 = vmul.f32 %v1179, %v1310
        %v1312 = vrcp.pop %v1287
        %v1313 = vmul.f32 %v1181, %v1312
        %v1314 = vrcp.pop %v1291
        %v1315 = vmul.f32 %v1183, %v1314
        %1317 = vset.pattern.permute.xlu0 0
        %1318 = vperm.xlu0 %1317, %v1301
        %v1319 = vpop.permute.xlu0 %1318
        %1322 = vset.pattern.permute.xlu0 0
        %1323 = vperm.xlu0 %1322, %v1303
        %v1324 = vpop.permute.xlu0 %1323
        %1327 = vset.pattern.permute.xlu0 0
        %1328 = vperm.xlu0 %1327, %v1305
        %v1329 = vpop.permute.xlu0 %1328
        %1332 = vset.pattern.permute.xlu0 0
        %1333 = vperm.xlu0 %1332, %v1307
        %v1334 = vpop.permute.xlu0 %1333
        %1337 = vset.pattern.permute.xlu0 0
        %1338 = vperm.xlu0 %1337, %v1309
        %v1339 = vpop.permute.xlu0 %1338
        %1342 = vset.pattern.permute.xlu0 0
        %1343 = vperm.xlu0 %1342, %v1311
        %v1344 = vpop.permute.xlu0 %1343
        %1347 = vset.pattern.permute.xlu0 0
        %1348 = vperm.xlu0 %1347, %v1313
        %v1349 = vpop.permute.xlu0 %1348
        %1352 = vset.pattern.permute.xlu0 0
        %1353 = vperm.xlu0 %1352, %v1315
        %v1354 = vpop.permute.xlu0 %1353
        %v1356 = vmul.f32 %v1319, %v825
        %v1357 = vmul.f32 %v1324, %v826
        %v1358 = vmul.f32 %v1329, %v827
        %v1359 = vmul.f32 %v1334, %v828
        %v1360 = vmul.f32 %v1339, %v829
        %v1361 = vmul.f32 %v1344, %v830
        %v1362 = vmul.f32 %v1349, %v831
        %v1363 = vmul.f32 %v1354, %v832
        %vm1364 = vcmask 523520
        %v1365 = vsel %vm1364, %v1356, 0.0
        %v1366 = vrot.slane %v1365, 4
        %v1367 = vadd.f32 %v1365, %v1366
        %v1368 = vrot.slane %v1367, 2
        %v1369 = vadd.f32 %v1367, %v1368
        %v1370 = vrot.slane %v1369, 1
        %v1371 = vadd.f32 %v1369, %v1370
        %v1372 = vsel %vm1364, %v1357, 0.0
        %v1373 = vrot.slane %v1372, 4
        %v1374 = vadd.f32 %v1372, %v1373
        %v1375 = vrot.slane %v1374, 2
        %v1376 = vadd.f32 %v1374, %v1375
        %v1377 = vrot.slane %v1376, 1
        %v1378 = vadd.f32 %v1376, %v1377
        %v1379 = vsel %vm1364, %v1358, 0.0
        %v1380 = vrot.slane %v1379, 4
        %v1381 = vadd.f32 %v1379, %v1380
        %v1382 = vrot.slane %v1381, 2
        %v1383 = vadd.f32 %v1381, %v1382
        %v1384 = vrot.slane %v1383, 1
        %v1385 = vadd.f32 %v1383, %v1384
        %v1386 = vsel %vm1364, %v1359, 0.0
        %v1387 = vrot.slane %v1386, 4
        %v1388 = vadd.f32 %v1386, %v1387
        %v1389 = vrot.slane %v1388, 2
        %v1390 = vadd.f32 %v1388, %v1389
        %v1391 = vrot.slane %v1390, 1
        %v1392 = vadd.f32 %v1390, %v1391
        %v1393 = vsel %vm1364, %v1360, 0.0
        %v1394 = vrot.slane %v1393, 4
        %v1395 = vadd.f32 %v1393, %v1394
        %v1396 = vrot.slane %v1395, 2
        %v1397 = vadd.f32 %v1395, %v1396
        %v1398 = vrot.slane %v1397, 1
        %v1399 = vadd.f32 %v1397, %v1398
        %v1400 = vsel %vm1364, %v1361, 0.0
        %v1401 = vrot.slane %v1400, 4
        %v1402 = vadd.f32 %v1400, %v1401
        %v1403 = vrot.slane %v1402, 2
        %v1404 = vadd.f32 %v1402, %v1403
        %v1405 = vrot.slane %v1404, 1
        %v1406 = vadd.f32 %v1404, %v1405
        %v1407 = vsel %vm1364, %v1362, 0.0
        %v1408 = vrot.slane %v1407, 4
        %v1409 = vadd.f32 %v1407, %v1408
        %v1410 = vrot.slane %v1409, 2
        %v1411 = vadd.f32 %v1409, %v1410
        %v1412 = vrot.slane %v1411, 1
        %v1413 = vadd.f32 %v1411, %v1412
        %v1414 = vsel %vm1364, %v1363, 0.0
        %v1415 = vrot.slane %v1414, 4
        %v1416 = vadd.f32 %v1414, %v1415
        %v1417 = vrot.slane %v1416, 2
        %v1418 = vadd.f32 %v1416, %v1417
        %v1419 = vrot.slane %v1418, 1
        %v1420 = vadd.f32 %v1418, %v1419
        %v1429 = vsel %vm1100, %v1378, %v1371
        %v1430 = vsel %vm1102, %v1385, %v1429
        %v1431 = vsel %vm1104, %v1392, %v1430
        %v1432 = vsel %vm1106, %v1399, %v1431
        %v1433 = vsel %vm1108, %v1406, %v1432
        %v1434 = vsel %vm1110, %v1413, %v1433
        %v1435 = vsel %vm1112, %v1420, %v1434
        %1436 = vrot.lane.b32.xlu0 %v1435, 96
        %v1437 = vpop.permute.xlu0 %1436
        %v1439 = vadd.f32 %v932, %v1437
        %v1441 = vcombine.high %v1439, %v1439
        %v1443 = vunpack.c.l.s4 1966171168
        %v1444 = vunpack.c.0.s8 %v1443
        %v1445 = vlaneseq
        %v1446 = vshrl.u32 %v1445, 7
        %v1447 = vsub.s32 %v1444, %v1446
        %v1448 = vrot.slane %v1439, %v1447
        %v1450 = vunpack.c.l.s4 1966171168
        %v1451 = vunpack.c.0.s8 %v1450
        %v1452 = vlaneseq
        %v1453 = vshrl.u32 %v1452, 7
        %v1454 = vsub.s32 %v1451, %v1453
        %v1455 = vrot.slane %v1441, %v1454
        %v1456 = vcombine.high %v1448, %v1448
        %v1457 = vcombine.high %v1455, %v1455
        %v1459 = vunpack.c.l.s4 1966171168
        %v1460 = vunpack.c.0.s8 %v1459
        %v1461 = vlaneseq
        %v1462 = vshrl.u32 %v1461, 7
        %v1463 = vsub.s32 %v1460, %v1462
        %v1464 = vrot.slane %v1448, %v1463
        %v1466 = vunpack.c.l.s4 1966171168
        %v1467 = vunpack.c.0.s8 %v1466
        %v1468 = vlaneseq
        %v1469 = vshrl.u32 %v1468, 7
        %v1470 = vsub.s32 %v1467, %v1469
        %v1471 = vrot.slane %v1455, %v1470
        %v1473 = vunpack.c.l.s4 1966171168
        %v1474 = vunpack.c.0.s8 %v1473
        %v1475 = vlaneseq
        %v1476 = vshrl.u32 %v1475, 7
        %v1477 = vsub.s32 %v1474, %v1476
        %v1478 = vrot.slane %v1456, %v1477
        %v1480 = vunpack.c.l.s4 1966171168
        %v1481 = vunpack.c.0.s8 %v1480
        %v1482 = vlaneseq
        %v1483 = vshrl.u32 %v1482, 7
        %v1484 = vsub.s32 %v1481, %v1483
        %v1485 = vrot.slane %v1457, %v1484
        %v1486 = vcombine.high %v1464, %v1464
        %v1487 = vcombine.high %v1471, %v1471
        %v1488 = vcombine.high %v1478, %v1478
        %v1489 = vcombine.high %v1485, %v1485
        %v1490 = vlaneseq
        %v1491 = vshrl.u32 %v1490, 7
        %v1492 = vsub.s32 0, %v1491
        %v1493 = vrot.slane %v1464, %v1492
        %v1494 = vlaneseq
        %v1495 = vshrl.u32 %v1494, 7
        %v1496 = vsub.s32 0, %v1495
        %v1497 = vrot.slane %v1478, %v1496
        %v1498 = vlaneseq
        %v1499 = vshrl.u32 %v1498, 7
        %v1500 = vsub.s32 0, %v1499
        %v1501 = vrot.slane %v1486, %v1500
        %v1502 = vlaneseq
        %v1503 = vshrl.u32 %v1502, 7
        %v1504 = vsub.s32 0, %v1503
        %v1505 = vrot.slane %v1488, %v1504
        %v1506 = vlaneseq
        %v1507 = vshrl.u32 %v1506, 7
        %v1508 = vsub.s32 0, %v1507
        %v1509 = vrot.slane %v1471, %v1508
        %v1510 = vlaneseq
        %v1511 = vshrl.u32 %v1510, 7
        %v1512 = vsub.s32 0, %v1511
        %v1513 = vrot.slane %v1485, %v1512
        %v1514 = vlaneseq
        %v1515 = vshrl.u32 %v1514, 7
        %v1516 = vsub.s32 0, %v1515
        %v1517 = vrot.slane %v1487, %v1516
        %v1518 = vlaneseq
        %v1519 = vshrl.u32 %v1518, 7
        %v1520 = vsub.s32 0, %v1519
        %v1521 = vrot.slane %v1489, %v1520
        %1522 = vrot.lane.b32.xlu0 %v1493, 32
        %v1523 = vpop.permute.xlu0 %1522
        %1524 = vrot.lane.b32.xlu0 %v1497, 32
        %v1525 = vpop.permute.xlu0 %1524
        %1526 = vrot.lane.b32.xlu0 %v1501, 32
        %v1527 = vpop.permute.xlu0 %1526
        %1528 = vrot.lane.b32.xlu0 %v1505, 32
        %v1529 = vpop.permute.xlu0 %1528
        %1530 = vrot.lane.b32.xlu0 %v1509, 32
        %v1531 = vpop.permute.xlu0 %1530
        %1532 = vrot.lane.b32.xlu0 %v1513, 32
        %v1533 = vpop.permute.xlu0 %1532
        %1534 = vrot.lane.b32.xlu0 %v1517, 32
        %v1535 = vpop.permute.xlu0 %1534
        %1536 = vrot.lane.b32.xlu0 %v1521, 32
        %v1537 = vpop.permute.xlu0 %1536
        %v1546 = vmul.f32 %v825, %v1523
        %v1547 = vmul.f32 %v826, %v1525
        %v1548 = vmul.f32 %v827, %v1527
        %v1549 = vmul.f32 %v828, %v1529
        %v1550 = vmul.f32 %v829, %v1531
        %v1551 = vmul.f32 %v830, %v1533
        %v1552 = vmul.f32 %v831, %v1535
        %v1553 = vmul.f32 %v832, %v1537
        %1562 = vrot.lane.b32.xlu0 %v1546, 96
        %v1563 = vpop.permute.xlu0 %1562
        %1564 = vrot.lane.b32.xlu0 %v1547, 96
        %v1565 = vpop.permute.xlu0 %1564
        %1566 = vrot.lane.b32.xlu0 %v1548, 96
        %v1567 = vpop.permute.xlu0 %1566
        %1568 = vrot.lane.b32.xlu0 %v1549, 96
        %v1569 = vpop.permute.xlu0 %1568
        %1570 = vrot.lane.b32.xlu0 %v1550, 96
        %v1571 = vpop.permute.xlu0 %1570
        %1572 = vrot.lane.b32.xlu0 %v1551, 96
        %v1573 = vpop.permute.xlu0 %1572
        %1574 = vrot.lane.b32.xlu0 %v1552, 96
        %v1575 = vpop.permute.xlu0 %1574
        %1576 = vrot.lane.b32.xlu0 %v1553, 96
        %v1577 = vpop.permute.xlu0 %1576
        %v1586 = vsel %vm1035, %v1563, 0.0
        %1587 = vadd.xlane.f32.xlu0 %v1586
        %v1588 = vpop.xlane.xlu0 %1587
        %v1589 = vsel %vm1035, %v1565, 0.0
        %1590 = vadd.xlane.f32.xlu0 %v1589
        %v1591 = vpop.xlane.xlu0 %1590
        %v1592 = vsel %vm1035, %v1567, 0.0
        %1593 = vadd.xlane.f32.xlu0 %v1592
        %v1594 = vpop.xlane.xlu0 %1593
        %v1595 = vsel %vm1035, %v1569, 0.0
        %1596 = vadd.xlane.f32.xlu0 %v1595
        %v1597 = vpop.xlane.xlu0 %1596
        %v1598 = vsel %vm1035, %v1571, 0.0
        %1599 = vadd.xlane.f32.xlu0 %v1598
        %v1600 = vpop.xlane.xlu0 %1599
        %v1601 = vsel %vm1035, %v1573, 0.0
        %1602 = vadd.xlane.f32.xlu0 %v1601
        %v1603 = vpop.xlane.xlu0 %1602
        %v1604 = vsel %vm1035, %v1575, 0.0
        %1605 = vadd.xlane.f32.xlu0 %v1604
        %v1606 = vpop.xlane.xlu0 %1605
        %v1607 = vsel %vm1035, %v1577, 0.0
        %1608 = vadd.xlane.f32.xlu0 %v1607
        %v1609 = vpop.xlane.xlu0 %1608
        %v1618 = vlaneseq
        %v1619 = vshrl.u32 %v1618, 7
        %v1620 = vsub.s32 %v317, %v1619
        %v1621 = vrot.slane %v1588, %v1620
        %v1622 = vlaneseq
        %v1623 = vshrl.u32 %v1622, 7
        %v1624 = vsub.s32 %v317, %v1623
        %v1625 = vrot.slane %v1591, %v1624
        %v1626 = vlaneseq
        %v1627 = vshrl.u32 %v1626, 7
        %v1628 = vsub.s32 %v317, %v1627
        %v1629 = vrot.slane %v1594, %v1628
        %v1630 = vlaneseq
        %v1631 = vshrl.u32 %v1630, 7
        %v1632 = vsub.s32 %v317, %v1631
        %v1633 = vrot.slane %v1597, %v1632
        %v1634 = vlaneseq
        %v1635 = vshrl.u32 %v1634, 7
        %v1636 = vsub.s32 %v317, %v1635
        %v1637 = vrot.slane %v1600, %v1636
        %v1638 = vlaneseq
        %v1639 = vshrl.u32 %v1638, 7
        %v1640 = vsub.s32 %v317, %v1639
        %v1641 = vrot.slane %v1603, %v1640
        %v1642 = vlaneseq
        %v1643 = vshrl.u32 %v1642, 7
        %v1644 = vsub.s32 %v317, %v1643
        %v1645 = vrot.slane %v1606, %v1644
        %v1646 = vlaneseq
        %v1647 = vshrl.u32 %v1646, 7
        %v1648 = vsub.s32 %v317, %v1647
        %v1649 = vrot.slane %v1609, %v1648
        %v1650 = vsel %vm1100, %v1625, %v1621
        %v1651 = vsel %vm1102, %v1629, %v1650
        %v1652 = vsel %vm1104, %v1633, %v1651
        %v1653 = vsel %vm1106, %v1637, %v1652
        %v1654 = vsel %vm1108, %v1641, %v1653
        %v1655 = vsel %vm1110, %v1645, %v1654
        %v1656 = vsel %vm1112, %v1649, %v1655
        %v1658 = vsel %vm1115, %v1656, -inf
        %1659 = vmax.xlane.f32.xlu0 %v1658
        %v1660 = vpop.xlane.xlu0 %1659
        %v1662 = vlaneseq
        %v1663 = vshrl.u32 %v1662, 7
        %v1664 = vsub.s32 0, %v1663
        %v1665 = vrot.slane %v1660, %v1664
        %v1666 = vlaneseq
        %v1667 = vshrl.u32 %v1666, 7
        %v1668 = vsub.s32 1, %v1667
        %v1669 = vrot.slane %v1660, %v1668
        %v1670 = vlaneseq
        %v1671 = vshrl.u32 %v1670, 7
        %v1672 = vsub.s32 2, %v1671
        %v1673 = vrot.slane %v1660, %v1672
        %v1674 = vlaneseq
        %v1675 = vshrl.u32 %v1674, 7
        %v1676 = vsub.s32 3, %v1675
        %v1677 = vrot.slane %v1660, %v1676
        %v1678 = vlaneseq
        %v1679 = vshrl.u32 %v1678, 7
        %v1680 = vsub.s32 4, %v1679
        %v1681 = vrot.slane %v1660, %v1680
        %v1682 = vlaneseq
        %v1683 = vshrl.u32 %v1682, 7
        %v1684 = vsub.s32 5, %v1683
        %v1685 = vrot.slane %v1660, %v1684
        %v1686 = vlaneseq
        %v1687 = vshrl.u32 %v1686, 7
        %v1688 = vsub.s32 6, %v1687
        %v1689 = vrot.slane %v1660, %v1688
        %v1690 = vlaneseq
        %v1691 = vshrl.u32 %v1690, 7
        %v1692 = vsub.s32 7, %v1691
        %v1693 = vrot.slane %v1660, %v1692
        %v1702 = vsub.f32 %v1588, %v1665
        %v1703 = vsub.f32 %v1591, %v1669
        %v1704 = vsub.f32 %v1594, %v1673
        %v1705 = vsub.f32 %v1597, %v1677
        %v1706 = vsub.f32 %v1600, %v1681
        %v1707 = vsub.f32 %v1603, %v1685
        %v1708 = vsub.f32 %v1606, %v1689
        %v1709 = vsub.f32 %v1609, %v1693
        %v1710 = vmul.f32 %v1702, 1.442695
        %v1711 = vpow.pop %v1710
        %v1712 = vmul.f32 %v1703, 1.442695
        %v1713 = vpow.pop %v1712
        %v1714 = vmul.f32 %v1704, 1.442695
        %v1715 = vpow.pop %v1714
        %v1716 = vmul.f32 %v1705, 1.442695
        %v1717 = vpow.pop %v1716
        %v1718 = vmul.f32 %v1706, 1.442695
        %v1719 = vpow.pop %v1718
        %v1720 = vmul.f32 %v1707, 1.442695
        %v1721 = vpow.pop %v1720
        %v1722 = vmul.f32 %v1708, 1.442695
        %v1723 = vpow.pop %v1722
        %v1724 = vmul.f32 %v1709, 1.442695
        %v1725 = vpow.pop %v1724
        %1734 = vset.pattern.permute.xlu0 0
        %1735 = vperm.xlu0 %1734, %v1711
        %v1736 = vpop.permute.xlu0 %1735
        %1737 = vset.pattern.permute.xlu0 0
        %1738 = vperm.xlu0 %1737, %v1713
        %v1739 = vpop.permute.xlu0 %1738
        %1740 = vset.pattern.permute.xlu0 0
        %1741 = vperm.xlu0 %1740, %v1715
        %v1742 = vpop.permute.xlu0 %1741
        %1743 = vset.pattern.permute.xlu0 0
        %1744 = vperm.xlu0 %1743, %v1717
        %v1745 = vpop.permute.xlu0 %1744
        %1746 = vset.pattern.permute.xlu0 0
        %1747 = vperm.xlu0 %1746, %v1719
        %v1748 = vpop.permute.xlu0 %1747
        %1749 = vset.pattern.permute.xlu0 0
        %1750 = vperm.xlu0 %1749, %v1721
        %v1751 = vpop.permute.xlu0 %1750
        %1752 = vset.pattern.permute.xlu0 0
        %1753 = vperm.xlu0 %1752, %v1723
        %v1754 = vpop.permute.xlu0 %1753
        %1755 = vset.pattern.permute.xlu0 0
        %1756 = vperm.xlu0 %1755, %v1725
        %v1757 = vpop.permute.xlu0 %1756
        %v1758 = vlaneseq
        %v1759 = vshrl.u32 %v1758, 7
        %v1760 = vsub.s32 %v317, %v1759
        %v1761 = vrot.slane %v1736, %v1760
        %v1762 = vlaneseq
        %v1763 = vshrl.u32 %v1762, 7
        %v1764 = vsub.s32 %v317, %v1763
        %v1765 = vrot.slane %v1739, %v1764
        %v1766 = vlaneseq
        %v1767 = vshrl.u32 %v1766, 7
        %v1768 = vsub.s32 %v317, %v1767
        %v1769 = vrot.slane %v1742, %v1768
        %v1770 = vlaneseq
        %v1771 = vshrl.u32 %v1770, 7
        %v1772 = vsub.s32 %v317, %v1771
        %v1773 = vrot.slane %v1745, %v1772
        %v1774 = vlaneseq
        %v1775 = vshrl.u32 %v1774, 7
        %v1776 = vsub.s32 %v317, %v1775
        %v1777 = vrot.slane %v1748, %v1776
        %v1778 = vlaneseq
        %v1779 = vshrl.u32 %v1778, 7
        %v1780 = vsub.s32 %v317, %v1779
        %v1781 = vrot.slane %v1751, %v1780
        %v1782 = vlaneseq
        %v1783 = vshrl.u32 %v1782, 7
        %v1784 = vsub.s32 %v317, %v1783
        %v1785 = vrot.slane %v1754, %v1784
        %v1786 = vlaneseq
        %v1787 = vshrl.u32 %v1786, 7
        %v1788 = vsub.s32 %v317, %v1787
        %v1789 = vrot.slane %v1757, %v1788
        %v1790 = vsel %vm1100, %v1765, %v1761
        %v1791 = vsel %vm1102, %v1769, %v1790
        %v1792 = vsel %vm1104, %v1773, %v1791
        %v1793 = vsel %vm1106, %v1777, %v1792
        %v1794 = vsel %vm1108, %v1781, %v1793
        %v1795 = vsel %vm1110, %v1785, %v1794
        %v1796 = vsel %vm1112, %v1789, %v1795
        %v1798 = vsel %vm1115, %v1796, 0.0
        %1799 = vadd.xlane.f32.xlu0 %v1798
        %v1800 = vpop.xlane.xlu0 %1799
        %v1802 = vlaneseq
        %v1803 = vshrl.u32 %v1802, 7
        %v1804 = vsub.s32 0, %v1803
        %v1805 = vrot.slane %v1800, %v1804
        %v1806 = vlaneseq
        %v1807 = vshrl.u32 %v1806, 7
        %v1808 = vsub.s32 1, %v1807
        %v1809 = vrot.slane %v1800, %v1808
        %v1810 = vlaneseq
        %v1811 = vshrl.u32 %v1810, 7
        %v1812 = vsub.s32 2, %v1811
        %v1813 = vrot.slane %v1800, %v1812
        %v1814 = vlaneseq
        %v1815 = vshrl.u32 %v1814, 7
        %v1816 = vsub.s32 3, %v1815
        %v1817 = vrot.slane %v1800, %v1816
        %v1818 = vlaneseq
        %v1819 = vshrl.u32 %v1818, 7
        %v1820 = vsub.s32 4, %v1819
        %v1821 = vrot.slane %v1800, %v1820
        %v1822 = vlaneseq
        %v1823 = vshrl.u32 %v1822, 7
        %v1824 = vsub.s32 5, %v1823
        %v1825 = vrot.slane %v1800, %v1824
        %v1826 = vlaneseq
        %v1827 = vshrl.u32 %v1826, 7
        %v1828 = vsub.s32 6, %v1827
        %v1829 = vrot.slane %v1800, %v1828
        %v1830 = vlaneseq
        %v1831 = vshrl.u32 %v1830, 7
        %v1832 = vsub.s32 7, %v1831
        %v1833 = vrot.slane %v1800, %v1832
        %v1842 = vrcp.pop %v1805
        %v1843 = vmul.f32 %v1711, %v1842
        %v1844 = vrcp.pop %v1809
        %v1845 = vmul.f32 %v1713, %v1844
        %v1846 = vrcp.pop %v1813
        %v1847 = vmul.f32 %v1715, %v1846
        %v1848 = vrcp.pop %v1817
        %v1849 = vmul.f32 %v1717, %v1848
        %v1850 = vrcp.pop %v1821
        %v1851 = vmul.f32 %v1719, %v1850
        %v1852 = vrcp.pop %v1825
        %v1853 = vmul.f32 %v1721, %v1852
        %v1854 = vrcp.pop %v1829
        %v1855 = vmul.f32 %v1723, %v1854
        %v1856 = vrcp.pop %v1833
        %v1857 = vmul.f32 %v1725, %v1856
        %1859 = vset.pattern.permute.xlu0 0
        %1860 = vperm.xlu0 %1859, %v1843
        %v1861 = vpop.permute.xlu0 %1860
        %1864 = vset.pattern.permute.xlu0 0
        %1865 = vperm.xlu0 %1864, %v1845
        %v1866 = vpop.permute.xlu0 %1865
        %1869 = vset.pattern.permute.xlu0 0
        %1870 = vperm.xlu0 %1869, %v1847
        %v1871 = vpop.permute.xlu0 %1870
        %1874 = vset.pattern.permute.xlu0 0
        %1875 = vperm.xlu0 %1874, %v1849
        %v1876 = vpop.permute.xlu0 %1875
        %1879 = vset.pattern.permute.xlu0 0
        %1880 = vperm.xlu0 %1879, %v1851
        %v1881 = vpop.permute.xlu0 %1880
        %1884 = vset.pattern.permute.xlu0 0
        %1885 = vperm.xlu0 %1884, %v1853
        %v1886 = vpop.permute.xlu0 %1885
        %1889 = vset.pattern.permute.xlu0 0
        %1890 = vperm.xlu0 %1889, %v1855
        %v1891 = vpop.permute.xlu0 %1890
        %1894 = vset.pattern.permute.xlu0 0
        %1895 = vperm.xlu0 %1894, %v1857
        %v1896 = vpop.permute.xlu0 %1895
        %v1898 = vmul.f32 %v1861, %v825
        %v1899 = vmul.f32 %v1866, %v826
        %v1900 = vmul.f32 %v1871, %v827
        %v1901 = vmul.f32 %v1876, %v828
        %v1902 = vmul.f32 %v1881, %v829
        %v1903 = vmul.f32 %v1886, %v830
        %v1904 = vmul.f32 %v1891, %v831
        %v1905 = vmul.f32 %v1896, %v832
        %vm1906 = vcmask 785920
        %v1907 = vsel %vm1906, %v1898, 0.0
        %v1908 = vrot.slane %v1907, 4
        %v1909 = vadd.f32 %v1907, %v1908
        %v1910 = vrot.slane %v1909, 2
        %v1911 = vadd.f32 %v1909, %v1910
        %v1912 = vrot.slane %v1911, 1
        %v1913 = vadd.f32 %v1911, %v1912
        %v1914 = vsel %vm1906, %v1899, 0.0
        %v1915 = vrot.slane %v1914, 4
        %v1916 = vadd.f32 %v1914, %v1915
        %v1917 = vrot.slane %v1916, 2
        %v1918 = vadd.f32 %v1916, %v1917
        %v1919 = vrot.slane %v1918, 1
        %v1920 = vadd.f32 %v1918, %v1919
        %v1921 = vsel %vm1906, %v1900, 0.0
        %v1922 = vrot.slane %v1921, 4
        %v1923 = vadd.f32 %v1921, %v1922
        %v1924 = vrot.slane %v1923, 2
        %v1925 = vadd.f32 %v1923, %v1924
        %v1926 = vrot.slane %v1925, 1
        %v1927 = vadd.f32 %v1925, %v1926
        %v1928 = vsel %vm1906, %v1901, 0.0
        %v1929 = vrot.slane %v1928, 4
        %v1930 = vadd.f32 %v1928, %v1929
        %v1931 = vrot.slane %v1930, 2
        %v1932 = vadd.f32 %v1930, %v1931
        %v1933 = vrot.slane %v1932, 1
        %v1934 = vadd.f32 %v1932, %v1933
        %v1935 = vsel %vm1906, %v1902, 0.0
        %v1936 = vrot.slane %v1935, 4
        %v1937 = vadd.f32 %v1935, %v1936
        %v1938 = vrot.slane %v1937, 2
        %v1939 = vadd.f32 %v1937, %v1938
        %v1940 = vrot.slane %v1939, 1
        %v1941 = vadd.f32 %v1939, %v1940
        %v1942 = vsel %vm1906, %v1903, 0.0
        %v1943 = vrot.slane %v1942, 4
        %v1944 = vadd.f32 %v1942, %v1943
        %v1945 = vrot.slane %v1944, 2
        %v1946 = vadd.f32 %v1944, %v1945
        %v1947 = vrot.slane %v1946, 1
        %v1948 = vadd.f32 %v1946, %v1947
        %v1949 = vsel %vm1906, %v1904, 0.0
        %v1950 = vrot.slane %v1949, 4
        %v1951 = vadd.f32 %v1949, %v1950
        %v1952 = vrot.slane %v1951, 2
        %v1953 = vadd.f32 %v1951, %v1952
        %v1954 = vrot.slane %v1953, 1
        %v1955 = vadd.f32 %v1953, %v1954
        %v1956 = vsel %vm1906, %v1905, 0.0
        %v1957 = vrot.slane %v1956, 4
        %v1958 = vadd.f32 %v1956, %v1957
        %v1959 = vrot.slane %v1958, 2
        %v1960 = vadd.f32 %v1958, %v1959
        %v1961 = vrot.slane %v1960, 1
        %v1962 = vadd.f32 %v1960, %v1961
        %v1971 = vsel %vm1100, %v1920, %v1913
        %v1972 = vsel %vm1102, %v1927, %v1971
        %v1973 = vsel %vm1104, %v1934, %v1972
        %v1974 = vsel %vm1106, %v1941, %v1973
        %v1975 = vsel %vm1108, %v1948, %v1974
        %v1976 = vsel %vm1110, %v1955, %v1975
        %v1977 = vsel %vm1112, %v1962, %v1976
        %1978 = vrot.lane.b32.xlu0 %v1977, 64
        %v1979 = vpop.permute.xlu0 %1978
        %v1981 = vadd.f32 %v1439, %v1979
        %v1983 = vcombine.high %v1981, %v1981
        %v1985 = vunpack.c.l.s4 1966171168
        %v1986 = vunpack.c.0.s8 %v1985
        %v1987 = vlaneseq
        %v1988 = vshrl.u32 %v1987, 7
        %v1989 = vsub.s32 %v1986, %v1988
        %v1990 = vrot.slane %v1981, %v1989
        %v1992 = vunpack.c.l.s4 1966171168
        %v1993 = vunpack.c.0.s8 %v1992
        %v1994 = vlaneseq
        %v1995 = vshrl.u32 %v1994, 7
        %v1996 = vsub.s32 %v1993, %v1995
        %v1997 = vrot.slane %v1983, %v1996
        %v1998 = vcombine.high %v1990, %v1990
        %v1999 = vcombine.high %v1997, %v1997
        %v2001 = vunpack.c.l.s4 1966171168
        %v2002 = vunpack.c.0.s8 %v2001
        %v2003 = vlaneseq
        %v2004 = vshrl.u32 %v2003, 7
        %v2005 = vsub.s32 %v2002, %v2004
        %v2006 = vrot.slane %v1990, %v2005
        %v2008 = vunpack.c.l.s4 1966171168
        %v2009 = vunpack.c.0.s8 %v2008
        %v2010 = vlaneseq
        %v2011 = vshrl.u32 %v2010, 7
        %v2012 = vsub.s32 %v2009, %v2011
        %v2013 = vrot.slane %v1997, %v2012
        %v2015 = vunpack.c.l.s4 1966171168
        %v2016 = vunpack.c.0.s8 %v2015
        %v2017 = vlaneseq
        %v2018 = vshrl.u32 %v2017, 7
        %v2019 = vsub.s32 %v2016, %v2018
        %v2020 = vrot.slane %v1998, %v2019
        %v2022 = vunpack.c.l.s4 1966171168
        %v2023 = vunpack.c.0.s8 %v2022
        %v2024 = vlaneseq
        %v2025 = vshrl.u32 %v2024, 7
        %v2026 = vsub.s32 %v2023, %v2025
        %v2027 = vrot.slane %v1999, %v2026
        %v2028 = vcombine.high %v2006, %v2006
        %v2029 = vcombine.high %v2013, %v2013
        %v2030 = vcombine.high %v2020, %v2020
        %v2031 = vcombine.high %v2027, %v2027
        %v2032 = vlaneseq
        %v2033 = vshrl.u32 %v2032, 7
        %v2034 = vsub.s32 0, %v2033
        %v2035 = vrot.slane %v2006, %v2034
        %v2036 = vlaneseq
        %v2037 = vshrl.u32 %v2036, 7
        %v2038 = vsub.s32 0, %v2037
        %v2039 = vrot.slane %v2020, %v2038
        %v2040 = vlaneseq
        %v2041 = vshrl.u32 %v2040, 7
        %v2042 = vsub.s32 0, %v2041
        %v2043 = vrot.slane %v2028, %v2042
        %v2044 = vlaneseq
        %v2045 = vshrl.u32 %v2044, 7
        %v2046 = vsub.s32 0, %v2045
        %v2047 = vrot.slane %v2030, %v2046
        %v2048 = vlaneseq
        %v2049 = vshrl.u32 %v2048, 7
        %v2050 = vsub.s32 0, %v2049
        %v2051 = vrot.slane %v2013, %v2050
        %v2052 = vlaneseq
        %v2053 = vshrl.u32 %v2052, 7
        %v2054 = vsub.s32 0, %v2053
        %v2055 = vrot.slane %v2027, %v2054
        %v2056 = vlaneseq
        %v2057 = vshrl.u32 %v2056, 7
        %v2058 = vsub.s32 0, %v2057
        %v2059 = vrot.slane %v2029, %v2058
        %v2060 = vlaneseq
        %v2061 = vshrl.u32 %v2060, 7
        %v2062 = vsub.s32 0, %v2061
        %v2063 = vrot.slane %v2031, %v2062
        %2064 = vrot.lane.b32.xlu0 %v2035, 64
        %v2065 = vpop.permute.xlu0 %2064
        %2066 = vrot.lane.b32.xlu0 %v2039, 64
        %v2067 = vpop.permute.xlu0 %2066
        %2068 = vrot.lane.b32.xlu0 %v2043, 64
        %v2069 = vpop.permute.xlu0 %2068
        %2070 = vrot.lane.b32.xlu0 %v2047, 64
        %v2071 = vpop.permute.xlu0 %2070
        %2072 = vrot.lane.b32.xlu0 %v2051, 64
        %v2073 = vpop.permute.xlu0 %2072
        %2074 = vrot.lane.b32.xlu0 %v2055, 64
        %v2075 = vpop.permute.xlu0 %2074
        %2076 = vrot.lane.b32.xlu0 %v2059, 64
        %v2077 = vpop.permute.xlu0 %2076
        %2078 = vrot.lane.b32.xlu0 %v2063, 64
        %v2079 = vpop.permute.xlu0 %2078
        %v2088 = vmul.f32 %v825, %v2065
        %v2089 = vmul.f32 %v826, %v2067
        %v2090 = vmul.f32 %v827, %v2069
        %v2091 = vmul.f32 %v828, %v2071
        %v2092 = vmul.f32 %v829, %v2073
        %v2093 = vmul.f32 %v830, %v2075
        %v2094 = vmul.f32 %v831, %v2077
        %v2095 = vmul.f32 %v832, %v2079
        %2104 = vrot.lane.b32.xlu0 %v2088, 64
        %v2105 = vpop.permute.xlu0 %2104
        %2106 = vrot.lane.b32.xlu0 %v2089, 64
        %v2107 = vpop.permute.xlu0 %2106
        %2108 = vrot.lane.b32.xlu0 %v2090, 64
        %v2109 = vpop.permute.xlu0 %2108
        %2110 = vrot.lane.b32.xlu0 %v2091, 64
        %v2111 = vpop.permute.xlu0 %2110
        %2112 = vrot.lane.b32.xlu0 %v2092, 64
        %v2113 = vpop.permute.xlu0 %2112
        %2114 = vrot.lane.b32.xlu0 %v2093, 64
        %v2115 = vpop.permute.xlu0 %2114
        %2116 = vrot.lane.b32.xlu0 %v2094, 64
        %v2117 = vpop.permute.xlu0 %2116
        %2118 = vrot.lane.b32.xlu0 %v2095, 64
        %v2119 = vpop.permute.xlu0 %2118
        %v2128 = vsel %vm1035, %v2105, 0.0
        %2129 = vadd.xlane.f32.xlu0 %v2128
        %v2130 = vpop.xlane.xlu0 %2129
        %v2131 = vsel %vm1035, %v2107, 0.0
        %2132 = vadd.xlane.f32.xlu0 %v2131
        %v2133 = vpop.xlane.xlu0 %2132
        %v2134 = vsel %vm1035, %v2109, 0.0
        %2135 = vadd.xlane.f32.xlu0 %v2134
        %v2136 = vpop.xlane.xlu0 %2135
        %v2137 = vsel %vm1035, %v2111, 0.0
        %2138 = vadd.xlane.f32.xlu0 %v2137
        %v2139 = vpop.xlane.xlu0 %2138
        %v2140 = vsel %vm1035, %v2113, 0.0
        %2141 = vadd.xlane.f32.xlu0 %v2140
        %v2142 = vpop.xlane.xlu0 %2141
        %v2143 = vsel %vm1035, %v2115, 0.0
        %2144 = vadd.xlane.f32.xlu0 %v2143
        %v2145 = vpop.xlane.xlu0 %2144
        %v2146 = vsel %vm1035, %v2117, 0.0
        %2147 = vadd.xlane.f32.xlu0 %v2146
        %v2148 = vpop.xlane.xlu0 %2147
        %v2149 = vsel %vm1035, %v2119, 0.0
        %2150 = vadd.xlane.f32.xlu0 %v2149
        %v2151 = vpop.xlane.xlu0 %2150
        %v2160 = vlaneseq
        %v2161 = vshrl.u32 %v2160, 7
        %v2162 = vsub.s32 %v317, %v2161
        %v2163 = vrot.slane %v2130, %v2162
        %v2164 = vlaneseq
        %v2165 = vshrl.u32 %v2164, 7
        %v2166 = vsub.s32 %v317, %v2165
        %v2167 = vrot.slane %v2133, %v2166
        %v2168 = vlaneseq
        %v2169 = vshrl.u32 %v2168, 7
        %v2170 = vsub.s32 %v317, %v2169
        %v2171 = vrot.slane %v2136, %v2170
        %v2172 = vlaneseq
        %v2173 = vshrl.u32 %v2172, 7
        %v2174 = vsub.s32 %v317, %v2173
        %v2175 = vrot.slane %v2139, %v2174
        %v2176 = vlaneseq
        %v2177 = vshrl.u32 %v2176, 7
        %v2178 = vsub.s32 %v317, %v2177
        %v2179 = vrot.slane %v2142, %v2178
        %v2180 = vlaneseq
        %v2181 = vshrl.u32 %v2180, 7
        %v2182 = vsub.s32 %v317, %v2181
        %v2183 = vrot.slane %v2145, %v2182
        %v2184 = vlaneseq
        %v2185 = vshrl.u32 %v2184, 7
        %v2186 = vsub.s32 %v317, %v2185
        %v2187 = vrot.slane %v2148, %v2186
        %v2188 = vlaneseq
        %v2189 = vshrl.u32 %v2188, 7
        %v2190 = vsub.s32 %v317, %v2189
        %v2191 = vrot.slane %v2151, %v2190
        %v2192 = vsel %vm1100, %v2167, %v2163
        %v2193 = vsel %vm1102, %v2171, %v2192
        %v2194 = vsel %vm1104, %v2175, %v2193
        %v2195 = vsel %vm1106, %v2179, %v2194
        %v2196 = vsel %vm1108, %v2183, %v2195
        %v2197 = vsel %vm1110, %v2187, %v2196
        %v2198 = vsel %vm1112, %v2191, %v2197
        %v2200 = vsel %vm1115, %v2198, -inf
        %2201 = vmax.xlane.f32.xlu0 %v2200
        %v2202 = vpop.xlane.xlu0 %2201
        %v2204 = vlaneseq
        %v2205 = vshrl.u32 %v2204, 7
        %v2206 = vsub.s32 0, %v2205
        %v2207 = vrot.slane %v2202, %v2206
        %v2208 = vlaneseq
        %v2209 = vshrl.u32 %v2208, 7
        %v2210 = vsub.s32 1, %v2209
        %v2211 = vrot.slane %v2202, %v2210
        %v2212 = vlaneseq
        %v2213 = vshrl.u32 %v2212, 7
        %v2214 = vsub.s32 2, %v2213
        %v2215 = vrot.slane %v2202, %v2214
        %v2216 = vlaneseq
        %v2217 = vshrl.u32 %v2216, 7
        %v2218 = vsub.s32 3, %v2217
        %v2219 = vrot.slane %v2202, %v2218
        %v2220 = vlaneseq
        %v2221 = vshrl.u32 %v2220, 7
        %v2222 = vsub.s32 4, %v2221
        %v2223 = vrot.slane %v2202, %v2222
        %v2224 = vlaneseq
        %v2225 = vshrl.u32 %v2224, 7
        %v2226 = vsub.s32 5, %v2225
        %v2227 = vrot.slane %v2202, %v2226
        %v2228 = vlaneseq
        %v2229 = vshrl.u32 %v2228, 7
        %v2230 = vsub.s32 6, %v2229
        %v2231 = vrot.slane %v2202, %v2230
        %v2232 = vlaneseq
        %v2233 = vshrl.u32 %v2232, 7
        %v2234 = vsub.s32 7, %v2233
        %v2235 = vrot.slane %v2202, %v2234
        %v2244 = vsub.f32 %v2130, %v2207
        %v2245 = vsub.f32 %v2133, %v2211
        %v2246 = vsub.f32 %v2136, %v2215
        %v2247 = vsub.f32 %v2139, %v2219
        %v2248 = vsub.f32 %v2142, %v2223
        %v2249 = vsub.f32 %v2145, %v2227
        %v2250 = vsub.f32 %v2148, %v2231
        %v2251 = vsub.f32 %v2151, %v2235
        %v2252 = vmul.f32 %v2244, 1.442695
        %v2253 = vpow.pop %v2252
        %v2254 = vmul.f32 %v2245, 1.442695
        %v2255 = vpow.pop %v2254
        %v2256 = vmul.f32 %v2246, 1.442695
        %v2257 = vpow.pop %v2256
        %v2258 = vmul.f32 %v2247, 1.442695
        %v2259 = vpow.pop %v2258
        %v2260 = vmul.f32 %v2248, 1.442695
        %v2261 = vpow.pop %v2260
        %v2262 = vmul.f32 %v2249, 1.442695
        %v2263 = vpow.pop %v2262
        %v2264 = vmul.f32 %v2250, 1.442695
        %v2265 = vpow.pop %v2264
        %v2266 = vmul.f32 %v2251, 1.442695
        %v2267 = vpow.pop %v2266
        %2276 = vset.pattern.permute.xlu0 0
        %2277 = vperm.xlu0 %2276, %v2253
        %v2278 = vpop.permute.xlu0 %2277
        %2279 = vset.pattern.permute.xlu0 0
        %2280 = vperm.xlu0 %2279, %v2255
        %v2281 = vpop.permute.xlu0 %2280
        %2282 = vset.pattern.permute.xlu0 0
        %2283 = vperm.xlu0 %2282, %v2257
        %v2284 = vpop.permute.xlu0 %2283
        %2285 = vset.pattern.permute.xlu0 0
        %2286 = vperm.xlu0 %2285, %v2259
        %v2287 = vpop.permute.xlu0 %2286
        %2288 = vset.pattern.permute.xlu0 0
        %2289 = vperm.xlu0 %2288, %v2261
        %v2290 = vpop.permute.xlu0 %2289
        %2291 = vset.pattern.permute.xlu0 0
        %2292 = vperm.xlu0 %2291, %v2263
        %v2293 = vpop.permute.xlu0 %2292
        %2294 = vset.pattern.permute.xlu0 0
        %2295 = vperm.xlu0 %2294, %v2265
        %v2296 = vpop.permute.xlu0 %2295
        %2297 = vset.pattern.permute.xlu0 0
        %2298 = vperm.xlu0 %2297, %v2267
        %v2299 = vpop.permute.xlu0 %2298
        %v2300 = vlaneseq
        %v2301 = vshrl.u32 %v2300, 7
        %v2302 = vsub.s32 %v317, %v2301
        %v2303 = vrot.slane %v2278, %v2302
        %v2304 = vlaneseq
        %v2305 = vshrl.u32 %v2304, 7
        %v2306 = vsub.s32 %v317, %v2305
        %v2307 = vrot.slane %v2281, %v2306
        %v2308 = vlaneseq
        %v2309 = vshrl.u32 %v2308, 7
        %v2310 = vsub.s32 %v317, %v2309
        %v2311 = vrot.slane %v2284, %v2310
        %v2312 = vlaneseq
        %v2313 = vshrl.u32 %v2312, 7
        %v2314 = vsub.s32 %v317, %v2313
        %v2315 = vrot.slane %v2287, %v2314
        %v2316 = vlaneseq
        %v2317 = vshrl.u32 %v2316, 7
        %v2318 = vsub.s32 %v317, %v2317
        %v2319 = vrot.slane %v2290, %v2318
        %v2320 = vlaneseq
        %v2321 = vshrl.u32 %v2320, 7
        %v2322 = vsub.s32 %v317, %v2321
        %v2323 = vrot.slane %v2293, %v2322
        %v2324 = vlaneseq
        %v2325 = vshrl.u32 %v2324, 7
        %v2326 = vsub.s32 %v317, %v2325
        %v2327 = vrot.slane %v2296, %v2326
        %v2328 = vlaneseq
        %v2329 = vshrl.u32 %v2328, 7
        %v2330 = vsub.s32 %v317, %v2329
        %v2331 = vrot.slane %v2299, %v2330
        %v2332 = vsel %vm1100, %v2307, %v2303
        %v2333 = vsel %vm1102, %v2311, %v2332
        %v2334 = vsel %vm1104, %v2315, %v2333
        %v2335 = vsel %vm1106, %v2319, %v2334
        %v2336 = vsel %vm1108, %v2323, %v2335
        %v2337 = vsel %vm1110, %v2327, %v2336
        %v2338 = vsel %vm1112, %v2331, %v2337
        %v2340 = vsel %vm1115, %v2338, 0.0
        %2341 = vadd.xlane.f32.xlu0 %v2340
        %v2342 = vpop.xlane.xlu0 %2341
        %v2344 = vlaneseq
        %v2345 = vshrl.u32 %v2344, 7
        %v2346 = vsub.s32 0, %v2345
        %v2347 = vrot.slane %v2342, %v2346
        %v2348 = vlaneseq
        %v2349 = vshrl.u32 %v2348, 7
        %v2350 = vsub.s32 1, %v2349
        %v2351 = vrot.slane %v2342, %v2350
        %v2352 = vlaneseq
        %v2353 = vshrl.u32 %v2352, 7
        %v2354 = vsub.s32 2, %v2353
        %v2355 = vrot.slane %v2342, %v2354
        %v2356 = vlaneseq
        %v2357 = vshrl.u32 %v2356, 7
        %v2358 = vsub.s32 3, %v2357
        %v2359 = vrot.slane %v2342, %v2358
        %v2360 = vlaneseq
        %v2361 = vshrl.u32 %v2360, 7
        %v2362 = vsub.s32 4, %v2361
        %v2363 = vrot.slane %v2342, %v2362
        %v2364 = vlaneseq
        %v2365 = vshrl.u32 %v2364, 7
        %v2366 = vsub.s32 5, %v2365
        %v2367 = vrot.slane %v2342, %v2366
        %v2368 = vlaneseq
        %v2369 = vshrl.u32 %v2368, 7
        %v2370 = vsub.s32 6, %v2369
        %v2371 = vrot.slane %v2342, %v2370
        %v2372 = vlaneseq
        %v2373 = vshrl.u32 %v2372, 7
        %v2374 = vsub.s32 7, %v2373
        %v2375 = vrot.slane %v2342, %v2374
        %v2384 = vrcp.pop %v2347
        %v2385 = vmul.f32 %v2253, %v2384
        %v2386 = vrcp.pop %v2351
        %v2387 = vmul.f32 %v2255, %v2386
        %v2388 = vrcp.pop %v2355
        %v2389 = vmul.f32 %v2257, %v2388
        %v2390 = vrcp.pop %v2359
        %v2391 = vmul.f32 %v2259, %v2390
        %v2392 = vrcp.pop %v2363
        %v2393 = vmul.f32 %v2261, %v2392
        %v2394 = vrcp.pop %v2367
        %v2395 = vmul.f32 %v2263, %v2394
        %v2396 = vrcp.pop %v2371
        %v2397 = vmul.f32 %v2265, %v2396
        %v2398 = vrcp.pop %v2375
        %v2399 = vmul.f32 %v2267, %v2398
        %2401 = vset.pattern.permute.xlu0 0
        %2402 = vperm.xlu0 %2401, %v2385
        %v2403 = vpop.permute.xlu0 %2402
        %2406 = vset.pattern.permute.xlu0 0
        %2407 = vperm.xlu0 %2406, %v2387
        %v2408 = vpop.permute.xlu0 %2407
        %2411 = vset.pattern.permute.xlu0 0
        %2412 = vperm.xlu0 %2411, %v2389
        %v2413 = vpop.permute.xlu0 %2412
        %2416 = vset.pattern.permute.xlu0 0
        %2417 = vperm.xlu0 %2416, %v2391
        %v2418 = vpop.permute.xlu0 %2417
        %2421 = vset.pattern.permute.xlu0 0
        %2422 = vperm.xlu0 %2421, %v2393
        %v2423 = vpop.permute.xlu0 %2422
        %2426 = vset.pattern.permute.xlu0 0
        %2427 = vperm.xlu0 %2426, %v2395
        %v2428 = vpop.permute.xlu0 %2427
        %2431 = vset.pattern.permute.xlu0 0
        %2432 = vperm.xlu0 %2431, %v2397
        %v2433 = vpop.permute.xlu0 %2432
        %2436 = vset.pattern.permute.xlu0 0
        %2437 = vperm.xlu0 %2436, %v2399
        %v2438 = vpop.permute.xlu0 %2437
        %v2440 = vmul.f32 %v2403, %v825
        %v2441 = vmul.f32 %v2408, %v826
        %v2442 = vmul.f32 %v2413, %v827
        %v2443 = vmul.f32 %v2418, %v828
        %v2444 = vmul.f32 %v2423, %v829
        %v2445 = vmul.f32 %v2428, %v830
        %v2446 = vmul.f32 %v2433, %v831
        %v2447 = vmul.f32 %v2438, %v832
        %vm2448 = vcmask 1048320
        %v2449 = vsel %vm2448, %v2440, 0.0
        %v2450 = vrot.slane %v2449, 4
        %v2451 = vadd.f32 %v2449, %v2450
        %v2452 = vrot.slane %v2451, 2
        %v2453 = vadd.f32 %v2451, %v2452
        %v2454 = vrot.slane %v2453, 1
        %v2455 = vadd.f32 %v2453, %v2454
        %v2456 = vsel %vm2448, %v2441, 0.0
        %v2457 = vrot.slane %v2456, 4
        %v2458 = vadd.f32 %v2456, %v2457
        %v2459 = vrot.slane %v2458, 2
        %v2460 = vadd.f32 %v2458, %v2459
        %v2461 = vrot.slane %v2460, 1
        %v2462 = vadd.f32 %v2460, %v2461
        %v2463 = vsel %vm2448, %v2442, 0.0
        %v2464 = vrot.slane %v2463, 4
        %v2465 = vadd.f32 %v2463, %v2464
        %v2466 = vrot.slane %v2465, 2
        %v2467 = vadd.f32 %v2465, %v2466
        %v2468 = vrot.slane %v2467, 1
        %v2469 = vadd.f32 %v2467, %v2468
        %v2470 = vsel %vm2448, %v2443, 0.0
        %v2471 = vrot.slane %v2470, 4
        %v2472 = vadd.f32 %v2470, %v2471
        %v2473 = vrot.slane %v2472, 2
        %v2474 = vadd.f32 %v2472, %v2473
        %v2475 = vrot.slane %v2474, 1
        %v2476 = vadd.f32 %v2474, %v2475
        %v2477 = vsel %vm2448, %v2444, 0.0
        %v2478 = vrot.slane %v2477, 4
        %v2479 = vadd.f32 %v2477, %v2478
        %v2480 = vrot.slane %v2479, 2
        %v2481 = vadd.f32 %v2479, %v2480
        %v2482 = vrot.slane %v2481, 1
        %v2483 = vadd.f32 %v2481, %v2482
        %v2484 = vsel %vm2448, %v2445, 0.0
        %v2485 = vrot.slane %v2484, 4
        %v2486 = vadd.f32 %v2484, %v2485
        %v2487 = vrot.slane %v2486, 2
        %v2488 = vadd.f32 %v2486, %v2487
        %v2489 = vrot.slane %v2488, 1
        %v2490 = vadd.f32 %v2488, %v2489
        %v2491 = vsel %vm2448, %v2446, 0.0
        %v2492 = vrot.slane %v2491, 4
        %v2493 = vadd.f32 %v2491, %v2492
        %v2494 = vrot.slane %v2493, 2
        %v2495 = vadd.f32 %v2493, %v2494
        %v2496 = vrot.slane %v2495, 1
        %v2497 = vadd.f32 %v2495, %v2496
        %v2498 = vsel %vm2448, %v2447, 0.0
        %v2499 = vrot.slane %v2498, 4
        %v2500 = vadd.f32 %v2498, %v2499
        %v2501 = vrot.slane %v2500, 2
        %v2502 = vadd.f32 %v2500, %v2501
        %v2503 = vrot.slane %v2502, 1
        %v2504 = vadd.f32 %v2502, %v2503
        %v2513 = vsel %vm1100, %v2462, %v2455
        %v2514 = vsel %vm1102, %v2469, %v2513
        %v2515 = vsel %vm1104, %v2476, %v2514
        %v2516 = vsel %vm1106, %v2483, %v2515
        %v2517 = vsel %vm1108, %v2490, %v2516
        %v2518 = vsel %vm1110, %v2497, %v2517
        %v2519 = vsel %vm1112, %v2504, %v2518
        %2520 = vrot.lane.b32.xlu0 %v2519, 32
        %v2521 = vpop.permute.xlu0 %2520
        %v2523 = vadd.f32 %v1981, %v2521
        %v2524 = vpack.c.bf16 %v2523, %v2523
        %v2525 = vld [vmem:[%s5] sm:$0xf]
        %v2526 = vld [vmem:[%s5 + $0x4] sm:$0xf]
        %v2527 = vld [vmem:[%s5 + $0x8] sm:$0xf]
        %v2528 = vld [vmem:[%s5 + $0xc] sm:$0xf]
        %v2533 = vunpack.c.l.b16 %v2525
        %v2534 = vunpack.c.l.b16 %v2526
        %v2535 = vunpack.c.l.b16 %v2527
        %v2536 = vunpack.c.l.b16 %v2528
        %v2537 = vpack.c.b16 %v2534, %v2533
        %v2538 = vpack.c.b16 %v2536, %v2535
        %v2542 = vsel %vm1035, %v2524, 0
        %2544 = vmatprep.subr.bf16.mxu0 0
        %2545 = vmatpush1.bf16.msra.mxu0 %v2537
        %2546 = vmatprep.subr.bf16.mxu0 0
        %2547 = vmatpush1.bf16.msra.mxu0 %v2538
        %2548 = vmatprep.subr.bf16.mxu0 0
        %2549 = vmatpush1.bf16.msra.mxu0 0
        %2550 = vmatprep.subr.bf16.mxu0 0
        %2551 = vmatpush1.bf16.msra.mxu0 0
        %2552 = vmatprep.subr.bf16.mxu0 0
        %2553 = vmatpush1.bf16.msra.mxu0 0
        %2554 = vmatprep.subr.bf16.mxu0 0
        %2555 = vmatpush1.bf16.msra.mxu0 0
        %2556 = vmatprep.subr.bf16.mxu0 0
        %2557 = vmatpush1.bf16.msra.mxu0 0
        %2558 = vmatprep.subr.bf16.mxu0 0
        %2559 = vmatpush1.bf16.msra.mxu0 0
        %2560 = vmatprep.subr.bf16.mxu0 0
        %2561 = vmatpush1.bf16.msra.mxu0 0
        %2562 = vmatprep.subr.bf16.mxu0 0
        %2563 = vmatpush1.bf16.msra.mxu0 0
        %2564 = vmatprep.subr.bf16.mxu0 0
        %2565 = vmatpush1.bf16.msra.mxu0 0
        %2566 = vmatprep.subr.bf16.mxu0 0
        %2567 = vmatpush1.bf16.msra.mxu0 0
        %2568 = vmatprep.subr.bf16.mxu0 0
        %2569 = vmatpush1.bf16.msra.mxu0 0
        %2570 = vmatprep.subr.bf16.mxu0 0
        %2571 = vmatpush1.bf16.msra.mxu0 0
        %2572 = vmatprep.subr.bf16.mxu0 0
        %2573 = vmatpush1.bf16.msra.mxu0 0
        %2574 = vmatprep.subr.bf16.mxu0 0
        %2575 = vmatpush1.bf16.msra.mxu0 0
        %2576 = vmatprep.mubr.bf16.mxu0 0
        %2577 = vmatmul.mubr.bf16.gmra.mrb[0].mxu0 %v2542
        %v2578 = vpop.f32.mrb[0].mxu0
        %v2579 = vadd.f32 0.0, %v2578
        %v2580 = vpop.f32.mrb[0].mxu0
        %v2581 = vpop.f32.mrb[0].mxu0
        %v2582 = vpop.f32.mrb[0].mxu0
        %2583 = vdwg.mxu0
        %2584 = vst [vmem:[%s289] sm:$0xff] %v2579
        %2585 = vmax.xlane.f32.xlu0 %v2579
        %v2586 = vpop.xlane.xlu0 %2585
        %v2587 = vsub.f32 %v2579, %v2586
        %v2588 = vmul.f32 %v2587, 1.442695
        %v2589 = vpow.pop %v2588
        %vm2590 = vcmp.lt.s32.totalorder %v317, 64
        %v2591 = vsel %vm2590, %v2589, 0.0
        %2592 = vadd.xlane.f32.xlu0 %v2591
        %v2593 = vpop.xlane.xlu0 %2592
        %v2594 = vrcp.pop %v2593
        %v2595 = vmul.f32 %v2591, %v2594
        %2596 = vst [vmem:[%s296] sm:$0xff] %v2595
        %s2597 = sand.u32 %s169, 1
        %s2598 = scalar_lea.sflag [#allocation3], %s2597
        %s2599 = sand.u32 %s169, 1
        %s2600 = smul.addr %s2599, 8
        %s2601 = scalar_lea.vmem [#allocation2], %s2600
        %s2602 = sand.u32 %s195, 1
        %s2603 = scalar_lea.sflag [#allocation5], %s2602
        %s2604 = sand.u32 %s195, 1
        %s2605 = smul.addr %s2604, 8
        %s2606 = scalar_lea.vmem [#allocation4], %s2605
        // Predicated region
        $region45: #{tpu_custom_call.1} parent=43 // pred_check
          %p2607 = pneg %p179
        $region46: #{tpu_custom_call.1} parent=43 // pred_check_branch
          %2609 = sbr.rel (%p2607) target = $region48
        $region47: #{tpu_custom_call.1} parent=43 // pred_region
          %s2611 = ssub.s32 128, 128
          %2612 = vsyncadd %s2598, %s2611
          %s2613 = smul.addr %s25, 128
          %s2614 = scalar_lea.hbm %s6, %s2613
          %s2616 = sshll.u32 %s2601, 4
          %s2617 = int_to_ptr.vmem [resolvable:$true] %s2616
          %2619 = dma.vmem_to_hbm [thread:$0]  %s2617, 128, %s2614, %s2598
        $region48: #{tpu_custom_call.1} parent=43 // pred_fallthru
          _
        // Predicated region
        $region49: #{tpu_custom_call.1} parent=43 // pred_check
          %p2620 = pneg %p205
        $region50: #{tpu_custom_call.1} parent=43 // pred_check_branch
          %2622 = sbr.rel (%p2620) target = $region52
        $region51: #{tpu_custom_call.1} parent=43 // pred_region
          %s2624 = ssub.s32 128, 128
          %2625 = vsyncadd %s2603, %s2624
          %s2626 = smul.addr %s25, 128
          %s2627 = scalar_lea.hbm %s7, %s2626
          %s2629 = sshll.u32 %s2606, 4
          %s2630 = int_to_ptr.vmem [resolvable:$true] %s2629
          %2632 = dma.vmem_to_hbm [thread:$0]  %s2630, 128, %s2627, %s2603
        $region52: #{tpu_custom_call.1} parent=43 // pred_fallthru
          _
      $region44: #{tpu_custom_call.1} parent=5 // pred_fallthru
        _
      %p2633 = scmp.le.s32.totalorder 2, %s20
      // Predicated region
      $region53: #{tpu_custom_call.1} parent=5 // pred_check
        %p2634 = pneg %p2633
      $region54: #{tpu_custom_call.1} parent=5 // pred_check_branch
        %2636 = sbr.rel (%p2634) target = $region56
      $region55: #{tpu_custom_call.1} parent=5 // pred_region
        %s2637 = ssub.s32 %s20, 2
        // Predicated region
        $region57: #{tpu_custom_call.1} parent=55 // pred_check
          %p2638 = pneg %p185
        $region58: #{tpu_custom_call.1} parent=55 // pred_check_branch
          %2640 = sbr.rel (%p2638) target = $region60
        $region59: #{tpu_custom_call.1} parent=55 // pred_region
          %s2641 = sand.u32 %s170, 1
          %s2642 = scalar_lea.sflag [#allocation3], %s2641
          %s2643 = sand.u32 %s170, 1
          %s2644 = smul.addr %s2643, 8
          %s2645 = scalar_lea.vmem [#allocation2], %s2644
          %2646 = dma.done %s2642, 128
        $region60: #{tpu_custom_call.1} parent=55 // pred_fallthru
          _
        // Predicated region
        $region61: #{tpu_custom_call.1} parent=55 // pred_check
          %p2647 = pneg %p211
        $region62: #{tpu_custom_call.1} parent=55 // pred_check_branch
          %2649 = sbr.rel (%p2647) target = $region64
        $region63: #{tpu_custom_call.1} parent=55 // pred_region
          %s2650 = sand.u32 %s196, 1
          %s2651 = scalar_lea.sflag [#allocation5], %s2650
          %s2652 = sand.u32 %s196, 1
          %s2653 = smul.addr %s2652, 8
          %s2654 = scalar_lea.vmem [#allocation4], %s2653
          %2655 = dma.done %s2651, 128
        $region64: #{tpu_custom_call.1} parent=55 // pred_fallthru
          _
      $region56: #{tpu_custom_call.1} parent=5 // pred_fallthru
        _
    $region6: #{tpu_custom_call.1} parent=1 // loop_footer
      %s24 = sadd.s32 1, %s20
    $region7: #{tpu_custom_call.1} parent=1 // loop_footer_branch
      %19 = sbr.rel target = $region3
    $region8: #{tpu_custom_call.1} parent=1 // loop_exit
      _
    %2656 = vsyncpa [#allocation3], 1
    %s2657 = scalar_lea.sflag [#allocation3], 1
    %2658 = vsyncpa %s2657, 1
    %2659 = vsyncpa [#allocation5], 1
    %s2660 = scalar_lea.sflag [#allocation5], 1
    %2661 = vsyncpa %s2660, 1

</llo_original>
